<compile_context>
chip_gen: v5e
topology: v5e:2x2
jax: 0.10.0
libtpu: 0.0.40
codegen_flags: <defaults>
</compile_context>

<pallas_src>
import jax
import jax.numpy as jnp
from jax.experimental import pallas as pl
from jax.experimental.pallas import tpu as pltpu


# ----------------------------------------------------------------------------
# elementwise helpers (exact math to keep 1e-4 parity with the reference)
# ----------------------------------------------------------------------------
def _silu(y):
    return y * (1.0 / (1.0 + jnp.exp(-y)))


def _leaky(y):
    return jnp.where(y >= 0.0, y, 0.1 * y)


# ----------------------------------------------------------------------------
# fully fused CSP1 kernel: one image per grid step, (C, H*W) layout
# ----------------------------------------------------------------------------
def _make_csp1_kernel(H, W, c_, cp, nb):
    HW = H * W
    offsets = [(oy, ox) for oy in (-1, 0, 1) for ox in (-1, 0, 1)]

    def kernel(x_ref, w1_ref, s1_ref, b1_ref,
               rw1_ref, rs1_ref, rb1_ref, rw2_ref, rs2_ref, rb2_ref,
               w2c_ref, w3c_ref, sa_ref, ba_ref, sb_ref, bb_ref,
               w4_ref, s4_ref, b4_ref,
               o_ref, taps_ref):
        x = x_ref[...]                                       # (Cin, HW)

        # ---- per-lane validity masks for the 9 taps ("same" 3x3 padding) ---
        pos = jax.lax.broadcasted_iota(jnp.int32, (1, HW), 1)
        col = pos % W
        masks = []
        for oy, ox in offsets:
            conds = []
            if oy == -1:
                conds.append(pos >= W)                 # has a row above
            elif oy == 1:
                conds.append(pos < (H - 1) * W)        # has a row below
            if ox == -1:
                conds.append(col >= 1)                 # has a column left
            elif ox == 1:
                conds.append(col <= W - 2)             # has a column right
            m = None
            for cnd in conds:
                m = cnd if m is None else jnp.logical_and(m, cnd)
            masks.append(None if m is None else m.astype(jnp.float32))

        # ---- cv1: 1x1 conv + BN + SiLU -> h (cp, HW); pad rows stay 0 ------
        h = _silu(jnp.dot(w1_ref[...], x, preferred_element_type=jnp.float32)
                  * s1_ref[...] + b1_ref[...])

        # ---- residual blocks: h never leaves vregs / VMEM ------------------
        for b in range(nb):
            t = _silu(jnp.dot(rw1_ref[b], h,
                              preferred_element_type=jnp.float32)
                      * rs1_ref[b] + rb1_ref[b])
            # build the 9 shifted taps (XLU lane rolls) into a sublane-aligned
            # (9*cp, HW) VMEM buffer, then ONE K = 9*cp matmul for the 3x3
            for k, (oy, ox) in enumerate(offsets):
                s = oy * W + ox
                tap = t if s == 0 else pltpu.roll(t, (-s) % HW, axis=1)
                if masks[k] is not None:
                    tap = tap * masks[k]
                taps_ref[k * cp:(k + 1) * cp, :] = tap
            y = jnp.dot(rw2_ref[b], taps_ref[...],
                        preferred_element_type=jnp.float32)
            h = h + _silu(y * rs2_ref[b] + rb2_ref[b])

        # ---- tail: cv2/cv3 + BN + LeakyReLU + concat + cv4 + BN + SiLU -----
        z1 = _leaky(jnp.dot(w2c_ref[...], h,
                            preferred_element_type=jnp.float32)
                    * sa_ref[...] + ba_ref[...])
        z2 = _leaky(jnp.dot(w3c_ref[...], x,
                            preferred_element_type=jnp.float32)
                    * sb_ref[...] + bb_ref[...])
        z = jnp.concatenate([z1, z2], axis=0)                # (2*cp, HW)
        o = jnp.dot(w4_ref[...], z, preferred_element_type=jnp.float32)
        o_ref[...] = _silu(o * s4_ref[...] + b4_ref[...]).astype(o_ref.dtype)

    return kernel


# ----------------------------------------------------------------------------
# weight packing into the channels-in-sublanes kernel layout
# ----------------------------------------------------------------------------
def _pad2(a, rows, cols):
    out = jnp.zeros((rows, cols), jnp.float32)
    return out.at[:a.shape[0], :a.shape[1]].set(a.astype(jnp.float32))


def _col(v, rows):
    return _pad2(v.reshape(-1, 1), rows, 1)


def csp1_forward(x_nchw, params):
    x = x_nchw.astype(jnp.float32)
    N, Cin, H, W = x.shape
    HW = H * W
    c_ = params["c_"]
    cp = ((c_ + 7) // 8) * 8                 # channels padded to 8 sublanes
    Cout = params["cv4_w"].shape[0]
    nb = len(params["res"])
    nb_a = max(nb, 1)

    xm = x.reshape(N, Cin, HW)               # free reshape, native NCHW

    # -- pack weights (few KiB; hoist out of the forward pass in a real model)
    w1 = _pad2(params["cv1_w"], cp, Cin)
    s1 = _col(params["cv1_s"], cp)
    b1 = _col(params["cv1_b"], cp)

    if nb:
        rw1 = jnp.stack([_pad2(rb["w1"], cp, cp) for rb in params["res"]])
        rs1 = jnp.stack([_col(rb["s1"], cp) for rb in params["res"]])
        rb1 = jnp.stack([_col(rb["b1"], cp) for rb in params["res"]])
        rw2_list = []
        for rb in params["res"]:
            w2p = jnp.zeros((9, cp, cp), jnp.float32)
            w2p = w2p.at[:, :c_, :c_].set(rb["w2"].astype(jnp.float32))
            # W_big[o, k*cp + i] = w2[k, o, i]; pad rows/cols are exactly 0
            rw2_list.append(jnp.transpose(w2p, (1, 0, 2)).reshape(cp, 9 * cp))
        rw2 = jnp.stack(rw2_list)
        rs2 = jnp.stack([_col(rb["s2"], cp) for rb in params["res"]])
        rb2 = jnp.stack([_col(rb["b2"], cp) for rb in params["res"]])
    else:
        rw1 = jnp.zeros((1, cp, cp), jnp.float32)
        rw2 = jnp.zeros((1, cp, 9 * cp), jnp.float32)
        rs1 = rb1 = rs2 = rb2 = jnp.zeros((1, cp, 1), jnp.float32)

    w2c = _pad2(params["cv2_w"], cp, cp)
    w3c = _pad2(params["cv3_w"], cp, Cin)
    sa = _col(params["bn_s"][:c_], cp)
    sb = _col(params["bn_s"][c_:], cp)
    ba = _col(params["bn_b"][:c_], cp)
    bb = _col(params["bn_b"][c_:], cp)
    w4 = jnp.zeros((Cout, 2 * cp), jnp.float32)
    w4 = w4.at[:, :c_].set(params["cv4_w"][:, :c_].astype(jnp.float32))
    w4 = w4.at[:, cp:cp + c_].set(params["cv4_w"][:, c_:].astype(jnp.float32))
    s4 = params["cv4_s"].reshape(Cout, 1).astype(jnp.float32)
    b4 = params["cv4_b"].reshape(Cout, 1).astype(jnp.float32)

    rep2 = lambda shape: pl.BlockSpec(shape, lambda n: (0, 0))     # resident
    rep3 = lambda shape: pl.BlockSpec(shape, lambda n: (0, 0, 0))  # resident

    out = pl.pallas_call(
        _make_csp1_kernel(H, W, c_, cp, nb),
        out_shape=jax.ShapeDtypeStruct((N, Cout, HW), jnp.float32),
        grid=(N,),
        in_specs=[
            pl.BlockSpec((None, Cin, HW), lambda n: (n, 0, 0)),    # x image
            rep2((cp, Cin)), rep2((cp, 1)), rep2((cp, 1)),         # cv1
            rep3((nb_a, cp, cp)), rep3((nb_a, cp, 1)), rep3((nb_a, cp, 1)),
            rep3((nb_a, cp, 9 * cp)), rep3((nb_a, cp, 1)), rep3((nb_a, cp, 1)),
            rep2((cp, cp)), rep2((cp, Cin)),                       # cv2 / cv3
            rep2((cp, 1)), rep2((cp, 1)), rep2((cp, 1)), rep2((cp, 1)),
            rep2((Cout, 2 * cp)), rep2((Cout, 1)), rep2((Cout, 1)),
        ],
        out_specs=pl.BlockSpec((None, Cout, HW), lambda n: (n, 0, 0)),
        scratch_shapes=[pltpu.VMEM((9 * cp, HW), jnp.float32)],
        compiler_params=pltpu.CompilerParams(
            dimension_semantics=("parallel",)),
    )(xm, w1, s1, b1, rw1, rs1, rb1, rw2, rs2, rb2,
      w2c, w3c, sa, ba, sb, bb, w4, s4, b4)

    return out.reshape(N, Cout, H, W)


# ----------------------------------------------------------------------------
# parameter setup (deterministic synthetic weights / folded eval-mode BN)
# weights stored channels-first: [out, in] (1x1) and [tap, out, in] (3x3)
# ----------------------------------------------------------------------------
def _bn_fold(key, c, eps=1e-5):
    k1, k2, k3, k4 = jax.random.split(key, 4)
    gamma = 1.0 + 0.1 * jax.random.normal(k1, (c,), jnp.float32)
    beta = 0.1 * jax.random.normal(k2, (c,), jnp.float32)
    mean = 0.1 * jax.random.normal(k3, (c,), jnp.float32)
    var = 1.0 + 0.1 * jax.random.uniform(k4, (c,), jnp.float32)
    scale = gamma / jnp.sqrt(var + eps)
    bias = beta - mean * scale
    return scale, bias


def init_params(key, in_channels, out_channels, number_block, gw=0.5):
    c_ = int(out_channels * gw)
    keys = jax.random.split(key, 8 + 4 * number_block)
    nrm = lambda k, shape: 0.1 * jax.random.normal(k, shape, jnp.float32)
    p = {"c_": c_}
    p["cv1_w"] = nrm(keys[0], (c_, in_channels))
    p["cv1_s"], p["cv1_b"] = _bn_fold(keys[1], c_)
    p["cv2_w"] = nrm(keys[2], (c_, c_))
    p["cv3_w"] = nrm(keys[3], (c_, in_channels))
    p["bn_s"], p["bn_b"] = _bn_fold(keys[4], 2 * c_)
    p["cv4_w"] = nrm(keys[5], (out_channels, 2 * c_))
    p["cv4_s"], p["cv4_b"] = _bn_fold(keys[6], out_channels)
    res = []
    for i in range(number_block):
        kk = keys[8 + 4 * i: 8 + 4 * (i + 1)]
        rb = {"w1": nrm(kk[0], (c_, c_))}
        rb["s1"], rb["b1"] = _bn_fold(kk[1], c_)
        rb["w2"] = nrm(kk[2], (9, c_, c_))        # [tap k = (dy*3+dx), out, in]
        rb["s2"], rb["b2"] = _bn_fold(kk[3], c_)
        res.append(rb)
    p["res"] = res
    return p


# ----------------------------------------------------------------------------
# Pure-JAX reference (same math, no Pallas) for correctness check
# ----------------------------------------------------------------------------
def csp1_reference(x_nchw, params):
    x = x_nchw.astype(jnp.float32)
    N, Cin, H, W = x.shape
    HW = H * W
    c_ = params["c_"]
    hp = jax.lax.Precision.HIGHEST
    xm = x.reshape(N, Cin, HW)

    def cbl(a, wT, s, b):
        y = jnp.einsum("oc,nch->noh", wT, a, precision=hp)
        y = y * s.reshape(1, -1, 1) + b.reshape(1, -1, 1)
        return y * (1.0 / (1.0 + jnp.exp(-y)))

    h = cbl(xm, params["cv1_w"], params["cv1_s"], params["cv1_b"])
    for rb in params["res"]:
        t = cbl(h, rb["w1"], rb["s1"], rb["b1"])
        tp = jnp.pad(t.reshape(N, c_, H, W), ((0, 0), (0, 0), (1, 1), (1, 1)))
        acc = jnp.zeros((N, c_, H, W), jnp.float32)
        for k in range(9):
            dy, dx = k // 3, k % 3
            tap = tp[:, :, dy:dy + H, dx:dx + W]
            acc = acc + jnp.einsum("oi,nihw->nohw", rb["w2"][k], tap,
                                   precision=hp)
        y = acc.reshape(N, c_, HW)
        y = y * rb["s2"].reshape(1, -1, 1) + rb["b2"].reshape(1, -1, 1)
        y = y * (1.0 / (1.0 + jnp.exp(-y)))
        h = h + y
    y1 = jnp.einsum("oc,nch->noh", params["cv2_w"], h, precision=hp)
    y2 = jnp.einsum("oc,nch->noh", params["cv3_w"], xm, precision=hp)
    z = jnp.concatenate([y1, y2], axis=1)
    z = z * params["bn_s"].reshape(1, -1, 1) + params["bn_b"].reshape(1, -1, 1)
    z = jnp.where(z >= 0.0, z, 0.1 * z)
    o = cbl(z, params["cv4_w"], params["cv4_s"], params["cv4_b"])
    Cout = params["cv4_w"].shape[0]
    return o.reshape(N, Cout, H, W)


# ----------------------------------------------------------------------------
if __name__ == "__main__":
    in_channels, out_channels, number_block = 4, 8, 2
    key = jax.random.PRNGKey(0)
    kx, kp = jax.random.split(key)

    x = jax.random.normal(kx, (2, in_channels, 16, 16), jnp.float32)  # NCHW
    params = init_params(kp, in_channels, out_channels, number_block)

    out = jax.block_until_ready(csp1_forward(x, params))
    ref = jax.block_until_ready(csp1_reference(x, params))

    assert out.shape == (2, out_channels, 16, 16), out.shape
    err = float(jnp.max(jnp.abs(out - ref)))
    assert jnp.allclose(out, ref, atol=1e-4, rtol=1e-4), err
    print("KERNEL_OK")
</pallas_src>

<mosaic_0001>
module attributes {stable_mosaic.version = 11 : i64} {
  func.func @kernel(%arg0: i32, %arg1: memref<1x4x256xf32, #tpu.memory_space<vmem>>, %arg2: memref<8x4xf32, #tpu.memory_space<vmem>>, %arg3: memref<8x1xf32, #tpu.memory_space<vmem>>, %arg4: memref<8x1xf32, #tpu.memory_space<vmem>>, %arg5: memref<2x8x8xf32, #tpu.memory_space<vmem>>, %arg6: memref<2x8x1xf32, #tpu.memory_space<vmem>>, %arg7: memref<2x8x1xf32, #tpu.memory_space<vmem>>, %arg8: memref<2x8x72xf32, #tpu.memory_space<vmem>>, %arg9: memref<2x8x1xf32, #tpu.memory_space<vmem>>, %arg10: memref<2x8x1xf32, #tpu.memory_space<vmem>>, %arg11: memref<8x8xf32, #tpu.memory_space<vmem>>, %arg12: memref<8x4xf32, #tpu.memory_space<vmem>>, %arg13: memref<8x1xf32, #tpu.memory_space<vmem>>, %arg14: memref<8x1xf32, #tpu.memory_space<vmem>>, %arg15: memref<8x1xf32, #tpu.memory_space<vmem>>, %arg16: memref<8x1xf32, #tpu.memory_space<vmem>>, %arg17: memref<8x16xf32, #tpu.memory_space<vmem>>, %arg18: memref<8x1xf32, #tpu.memory_space<vmem>>, %arg19: memref<8x1xf32, #tpu.memory_space<vmem>>, %arg20: memref<1x8x256xf32, #tpu.memory_space<vmem>>, %arg21: memref<72x256xf32, #tpu.memory_space<vmem>>) attributes {dimension_semantics = [#tpu.dimension_semantics<parallel>], iteration_bounds = array<i64: 2>, scalar_prefetch = 0 : i64, scratch_operands = 1 : i64, tpu.core_type = #tpu.core_type<tc>, window_params = [{transform_indices = @transform_0, window_bounds = array<i64: 1, 4, 256>}, {pipeline_mode = #tpu.pipeline_mode<synchronous>, transform_indices = @transform_1, window_bounds = array<i64: 8, 4>}, {pipeline_mode = #tpu.pipeline_mode<synchronous>, transform_indices = @transform_2, window_bounds = array<i64: 8, 1>}, {pipeline_mode = #tpu.pipeline_mode<synchronous>, transform_indices = @transform_3, window_bounds = array<i64: 8, 1>}, {pipeline_mode = #tpu.pipeline_mode<synchronous>, transform_indices = @transform_4, window_bounds = array<i64: 2, 8, 8>}, {pipeline_mode = #tpu.pipeline_mode<synchronous>, transform_indices = @transform_5, window_bounds = array<i64: 2, 8, 1>}, {pipeline_mode = #tpu.pipeline_mode<synchronous>, transform_indices = @transform_6, window_bounds = array<i64: 2, 8, 1>}, {pipeline_mode = #tpu.pipeline_mode<synchronous>, transform_indices = @transform_7, window_bounds = array<i64: 2, 8, 72>}, {pipeline_mode = #tpu.pipeline_mode<synchronous>, transform_indices = @transform_8, window_bounds = array<i64: 2, 8, 1>}, {pipeline_mode = #tpu.pipeline_mode<synchronous>, transform_indices = @transform_9, window_bounds = array<i64: 2, 8, 1>}, {pipeline_mode = #tpu.pipeline_mode<synchronous>, transform_indices = @transform_10, window_bounds = array<i64: 8, 8>}, {pipeline_mode = #tpu.pipeline_mode<synchronous>, transform_indices = @transform_11, window_bounds = array<i64: 8, 4>}, {pipeline_mode = #tpu.pipeline_mode<synchronous>, transform_indices = @transform_12, window_bounds = array<i64: 8, 1>}, {pipeline_mode = #tpu.pipeline_mode<synchronous>, transform_indices = @transform_13, window_bounds = array<i64: 8, 1>}, {pipeline_mode = #tpu.pipeline_mode<synchronous>, transform_indices = @transform_14, window_bounds = array<i64: 8, 1>}, {pipeline_mode = #tpu.pipeline_mode<synchronous>, transform_indices = @transform_15, window_bounds = array<i64: 8, 1>}, {pipeline_mode = #tpu.pipeline_mode<synchronous>, transform_indices = @transform_16, window_bounds = array<i64: 8, 16>}, {pipeline_mode = #tpu.pipeline_mode<synchronous>, transform_indices = @transform_17, window_bounds = array<i64: 8, 1>}, {pipeline_mode = #tpu.pipeline_mode<synchronous>, transform_indices = @transform_18, window_bounds = array<i64: 8, 1>}, {transform_indices = @transform_19, window_bounds = array<i64: 1, 8, 256>}]} {
    %c0 = arith.constant 0 : index
    %c0_0 = arith.constant 0 : index
    %c0_1 = arith.constant 0 : index
    %0 = vector.load %arg1[%c0, %c0_0, %c0_1] : memref<1x4x256xf32, #tpu.memory_space<vmem>>, vector<1x4x256xf32>
    %1 = vector.shape_cast %0 : vector<1x4x256xf32> to vector<4x256xf32>
    %2 = tpu.iota {dimensions = array<i32: 1>} : vector<1x256xi32>
    %c16_i32 = arith.constant 16 : i32
    %c0_i32 = arith.constant 0 : i32
    %3 = arith.cmpi eq, %c16_i32, %c0_i32 : i32
    %c1_i32 = arith.constant 1 : i32
    %4 = arith.select %3, %c1_i32, %c16_i32 : i32
    %5 = vector.broadcast %4 : i32 to vector<1x256xi32>
    %6 = arith.remsi %2, %5 : vector<1x256xi32>
    %c0_i32_2 = arith.constant 0 : i32
    %7 = vector.broadcast %c0_i32_2 : i32 to vector<1x256xi32>
    %8 = arith.cmpi ne, %6, %7 : vector<1x256xi32>
    %c0_i32_3 = arith.constant 0 : i32
    %9 = vector.broadcast %c0_i32_3 : i32 to vector<1x256xi32>
    %10 = arith.cmpi slt, %6, %9 : vector<1x256xi32>
    %c0_i32_4 = arith.constant 0 : i32
    %11 = arith.cmpi slt, %4, %c0_i32_4 : i32
    %12 = vector.broadcast %11 : i1 to vector<1x256xi1>
    %13 = vector.broadcast %12 : vector<1x256xi1> to vector<1x256xi1>
    %14 = arith.xori %10, %13 : vector<1x256xi1>
    %15 = arith.andi %14, %8 : vector<1x256xi1>
    %16 = vector.broadcast %4 : i32 to vector<1x256xi32>
    %17 = arith.addi %6, %16 : vector<1x256xi32>
    %18 = arith.select %15, %17, %6 : vector<1x256xi1>, vector<1x256xi32>
    %c16_i32_5 = arith.constant 16 : i32
    %19 = vector.broadcast %c16_i32_5 : i32 to vector<1x256xi32>
    %20 = arith.cmpi sge, %2, %19 : vector<1x256xi32>
    %c1_i32_6 = arith.constant 1 : i32
    %21 = vector.broadcast %c1_i32_6 : i32 to vector<1x256xi32>
    %22 = arith.cmpi sge, %18, %21 : vector<1x256xi32>
    %23 = arith.andi %20, %22 : vector<1x256xi1>
    %24 = arith.extui %23 : vector<1x256xi1> to vector<1x256xi32>
    %25 = arith.sitofp %24 : vector<1x256xi32> to vector<1x256xf32>
    %c16_i32_7 = arith.constant 16 : i32
    %26 = vector.broadcast %c16_i32_7 : i32 to vector<1x256xi32>
    %27 = arith.cmpi sge, %2, %26 : vector<1x256xi32>
    %28 = arith.extui %27 : vector<1x256xi1> to vector<1x256xi32>
    %29 = arith.sitofp %28 : vector<1x256xi32> to vector<1x256xf32>
    %c16_i32_8 = arith.constant 16 : i32
    %30 = vector.broadcast %c16_i32_8 : i32 to vector<1x256xi32>
    %31 = arith.cmpi sge, %2, %30 : vector<1x256xi32>
    %c14_i32 = arith.constant 14 : i32
    %32 = vector.broadcast %c14_i32 : i32 to vector<1x256xi32>
    %33 = arith.cmpi sle, %18, %32 : vector<1x256xi32>
    %34 = arith.andi %31, %33 : vector<1x256xi1>
    %35 = arith.extui %34 : vector<1x256xi1> to vector<1x256xi32>
    %36 = arith.sitofp %35 : vector<1x256xi32> to vector<1x256xf32>
    %c1_i32_9 = arith.constant 1 : i32
    %37 = vector.broadcast %c1_i32_9 : i32 to vector<1x256xi32>
    %38 = arith.cmpi sge, %18, %37 : vector<1x256xi32>
    %39 = arith.extui %38 : vector<1x256xi1> to vector<1x256xi32>
    %40 = arith.sitofp %39 : vector<1x256xi32> to vector<1x256xf32>
    %c14_i32_10 = arith.constant 14 : i32
    %41 = vector.broadcast %c14_i32_10 : i32 to vector<1x256xi32>
    %42 = arith.cmpi sle, %18, %41 : vector<1x256xi32>
    %43 = arith.extui %42 : vector<1x256xi1> to vector<1x256xi32>
    %44 = arith.sitofp %43 : vector<1x256xi32> to vector<1x256xf32>
    %c240_i32 = arith.constant 240 : i32
    %45 = vector.broadcast %c240_i32 : i32 to vector<1x256xi32>
    %46 = arith.cmpi slt, %2, %45 : vector<1x256xi32>
    %c1_i32_11 = arith.constant 1 : i32
    %47 = vector.broadcast %c1_i32_11 : i32 to vector<1x256xi32>
    %48 = arith.cmpi sge, %18, %47 : vector<1x256xi32>
    %49 = arith.andi %46, %48 : vector<1x256xi1>
    %50 = arith.extui %49 : vector<1x256xi1> to vector<1x256xi32>
    %51 = arith.sitofp %50 : vector<1x256xi32> to vector<1x256xf32>
    %c240_i32_12 = arith.constant 240 : i32
    %52 = vector.broadcast %c240_i32_12 : i32 to vector<1x256xi32>
    %53 = arith.cmpi slt, %2, %52 : vector<1x256xi32>
    %54 = arith.extui %53 : vector<1x256xi1> to vector<1x256xi32>
    %55 = arith.sitofp %54 : vector<1x256xi32> to vector<1x256xf32>
    %c240_i32_13 = arith.constant 240 : i32
    %56 = vector.broadcast %c240_i32_13 : i32 to vector<1x256xi32>
    %57 = arith.cmpi slt, %2, %56 : vector<1x256xi32>
    %c14_i32_14 = arith.constant 14 : i32
    %58 = vector.broadcast %c14_i32_14 : i32 to vector<1x256xi32>
    %59 = arith.cmpi sle, %18, %58 : vector<1x256xi32>
    %60 = arith.andi %57, %59 : vector<1x256xi1>
    %61 = arith.extui %60 : vector<1x256xi1> to vector<1x256xi32>
    %62 = arith.sitofp %61 : vector<1x256xi32> to vector<1x256xf32>
    %c0_15 = arith.constant 0 : index
    %c0_16 = arith.constant 0 : index
    %63 = vector.load %arg2[%c0_15, %c0_16] : memref<8x4xf32, #tpu.memory_space<vmem>>, vector<8x4xf32>
    %cst = arith.constant dense<0.000000e+00> : vector<8x256xf32>
    %64 = tpu.matmul %63, %1, %cst {dimension_numbers = #tpu.dot_dimension_numbers<[1], [0], [0], [1], [0, 0, 1, 1], [], []>} : vector<8x4xf32>, vector<4x256xf32>, vector<8x256xf32> -> vector<8x256xf32>
    %c0_17 = arith.constant 0 : index
    %c0_18 = arith.constant 0 : index
    %65 = vector.load %arg3[%c0_17, %c0_18] : memref<8x1xf32, #tpu.memory_space<vmem>>, vector<8x1xf32>
    %66 = vector.broadcast %65 : vector<8x1xf32> to vector<8x256xf32>
    %67 = arith.mulf %64, %66 : vector<8x256xf32>
    %c0_19 = arith.constant 0 : index
    %c0_20 = arith.constant 0 : index
    %68 = vector.load %arg4[%c0_19, %c0_20] : memref<8x1xf32, #tpu.memory_space<vmem>>, vector<8x1xf32>
    %69 = vector.broadcast %68 : vector<8x1xf32> to vector<8x256xf32>
    %70 = arith.addf %67, %69 : vector<8x256xf32>
    %cst_21 = arith.constant 0.000000e+00 : f32
    %71 = vector.broadcast %cst_21 : f32 to vector<8x256xf32>
    %72 = arith.subf %71, %70 : vector<8x256xf32>
    %73 = math.exp %72 : vector<8x256xf32>
    %cst_22 = arith.constant 1.000000e+00 : f32
    %74 = vector.broadcast %cst_22 : f32 to vector<8x256xf32>
    %75 = arith.addf %74, %73 : vector<8x256xf32>
    %cst_23 = arith.constant 1.000000e+00 : f32
    %76 = vector.broadcast %cst_23 : f32 to vector<8x256xf32>
    %77 = arith.divf %76, %75 : vector<8x256xf32>
    %78 = arith.mulf %70, %77 : vector<8x256xf32>
    %c0_24 = arith.constant 0 : index
    %c0_25 = arith.constant 0 : index
    %c0_26 = arith.constant 0 : index
    %79 = vector.load %arg5[%c0_24, %c0_25, %c0_26] : memref<2x8x8xf32, #tpu.memory_space<vmem>>, vector<1x8x8xf32>
    %80 = vector.shape_cast %79 : vector<1x8x8xf32> to vector<8x8xf32>
    %cst_27 = arith.constant dense<0.000000e+00> : vector<8x256xf32>
    %81 = tpu.matmul %80, %78, %cst_27 {dimension_numbers = #tpu.dot_dimension_numbers<[1], [0], [0], [1], [0, 0, 1, 1], [], []>} : vector<8x8xf32>, vector<8x256xf32>, vector<8x256xf32> -> vector<8x256xf32>
    %c0_28 = arith.constant 0 : index
    %c0_29 = arith.constant 0 : index
    %c0_30 = arith.constant 0 : index
    %82 = vector.load %arg6[%c0_28, %c0_29, %c0_30] : memref<2x8x1xf32, #tpu.memory_space<vmem>>, vector<1x8x1xf32>
    %83 = vector.shape_cast %82 : vector<1x8x1xf32> to vector<8x1xf32>
    %84 = vector.broadcast %83 : vector<8x1xf32> to vector<8x256xf32>
    %85 = arith.mulf %81, %84 : vector<8x256xf32>
    %c0_31 = arith.constant 0 : index
    %c0_32 = arith.constant 0 : index
    %c0_33 = arith.constant 0 : index
    %86 = vector.load %arg7[%c0_31, %c0_32, %c0_33] : memref<2x8x1xf32, #tpu.memory_space<vmem>>, vector<1x8x1xf32>
    %87 = vector.shape_cast %86 : vector<1x8x1xf32> to vector<8x1xf32>
    %88 = vector.broadcast %87 : vector<8x1xf32> to vector<8x256xf32>
    %89 = arith.addf %85, %88 : vector<8x256xf32>
    %cst_34 = arith.constant 0.000000e+00 : f32
    %90 = vector.broadcast %cst_34 : f32 to vector<8x256xf32>
    %91 = arith.subf %90, %89 : vector<8x256xf32>
    %92 = math.exp %91 : vector<8x256xf32>
    %cst_35 = arith.constant 1.000000e+00 : f32
    %93 = vector.broadcast %cst_35 : f32 to vector<8x256xf32>
    %94 = arith.addf %93, %92 : vector<8x256xf32>
    %cst_36 = arith.constant 1.000000e+00 : f32
    %95 = vector.broadcast %cst_36 : f32 to vector<8x256xf32>
    %96 = arith.divf %95, %94 : vector<8x256xf32>
    %97 = arith.mulf %89, %96 : vector<8x256xf32>
    %c17_i32 = arith.constant 17 : i32
    %98 = tpu.dynamic_rotate %97 by %c17_i32 dim 1 : vector<8x256xf32>, i32 -> vector<8x256xf32>
    %99 = vector.broadcast %25 : vector<1x256xf32> to vector<8x256xf32>
    %100 = arith.mulf %98, %99 : vector<8x256xf32>
    %c0_37 = arith.constant 0 : index
    %c0_38 = arith.constant 0 : index
    %101 = vector.load %arg21[%c0_37, %c0_38] : memref<72x256xf32, #tpu.memory_space<vmem>>, vector<8x256xf32>
    tpu.vector_store %arg21[%c0_37, %c0_38], %100 {strides = array<i32>} : memref<72x256xf32, #tpu.memory_space<vmem>>, vector<8x256xf32>,
    %c16_i32_39 = arith.constant 16 : i32
    %102 = tpu.dynamic_rotate %97 by %c16_i32_39 dim 1 : vector<8x256xf32>, i32 -> vector<8x256xf32>
    %103 = vector.broadcast %29 : vector<1x256xf32> to vector<8x256xf32>
    %104 = arith.mulf %102, %103 : vector<8x256xf32>
    %c8 = arith.constant 8 : index
    %c0_40 = arith.constant 0 : index
    %105 = vector.load %arg21[%c8, %c0_40] : memref<72x256xf32, #tpu.memory_space<vmem>>, vector<8x256xf32>
    tpu.vector_store %arg21[%c8, %c0_40], %104 {strides = array<i32>} : memref<72x256xf32, #tpu.memory_space<vmem>>, vector<8x256xf32>,
    %c15_i32 = arith.constant 15 : i32
    %106 = tpu.dynamic_rotate %97 by %c15_i32 dim 1 : vector<8x256xf32>, i32 -> vector<8x256xf32>
    %107 = vector.broadcast %36 : vector<1x256xf32> to vector<8x256xf32>
    %108 = arith.mulf %106, %107 : vector<8x256xf32>
    %c16 = arith.constant 16 : index
    %c0_41 = arith.constant 0 : index
    %109 = vector.load %arg21[%c16, %c0_41] : memref<72x256xf32, #tpu.memory_space<vmem>>, vector<8x256xf32>
    tpu.vector_store %arg21[%c16, %c0_41], %108 {strides = array<i32>} : memref<72x256xf32, #tpu.memory_space<vmem>>, vector<8x256xf32>,
    %c1_i32_42 = arith.constant 1 : i32
    %110 = tpu.dynamic_rotate %97 by %c1_i32_42 dim 1 : vector<8x256xf32>, i32 -> vector<8x256xf32>
    %111 = vector.broadcast %40 : vector<1x256xf32> to vector<8x256xf32>
    %112 = arith.mulf %110, %111 : vector<8x256xf32>
    %c24 = arith.constant 24 : index
    %c0_43 = arith.constant 0 : index
    %113 = vector.load %arg21[%c24, %c0_43] : memref<72x256xf32, #tpu.memory_space<vmem>>, vector<8x256xf32>
    tpu.vector_store %arg21[%c24, %c0_43], %112 {strides = array<i32>} : memref<72x256xf32, #tpu.memory_space<vmem>>, vector<8x256xf32>,
    %c32 = arith.constant 32 : index
    %c0_44 = arith.constant 0 : index
    %114 = vector.load %arg21[%c32, %c0_44] : memref<72x256xf32, #tpu.memory_space<vmem>>, vector<8x256xf32>
    tpu.vector_store %arg21[%c32, %c0_44], %97 {strides = array<i32>} : memref<72x256xf32, #tpu.memory_space<vmem>>, vector<8x256xf32>,
    %c255_i32 = arith.constant 255 : i32
    %115 = tpu.dynamic_rotate %97 by %c255_i32 dim 1 : vector<8x256xf32>, i32 -> vector<8x256xf32>
    %116 = vector.broadcast %44 : vector<1x256xf32> to vector<8x256xf32>
    %117 = arith.mulf %115, %116 : vector<8x256xf32>
    %c40 = arith.constant 40 : index
    %c0_45 = arith.constant 0 : index
    %118 = vector.load %arg21[%c40, %c0_45] : memref<72x256xf32, #tpu.memory_space<vmem>>, vector<8x256xf32>
    tpu.vector_store %arg21[%c40, %c0_45], %117 {strides = array<i32>} : memref<72x256xf32, #tpu.memory_space<vmem>>, vector<8x256xf32>,
    %c241_i32 = arith.constant 241 : i32
    %119 = tpu.dynamic_rotate %97 by %c241_i32 dim 1 : vector<8x256xf32>, i32 -> vector<8x256xf32>
    %120 = vector.broadcast %51 : vector<1x256xf32> to vector<8x256xf32>
    %121 = arith.mulf %119, %120 : vector<8x256xf32>
    %c48 = arith.constant 48 : index
    %c0_46 = arith.constant 0 : index
    %122 = vector.load %arg21[%c48, %c0_46] : memref<72x256xf32, #tpu.memory_space<vmem>>, vector<8x256xf32>
    tpu.vector_store %arg21[%c48, %c0_46], %121 {strides = array<i32>} : memref<72x256xf32, #tpu.memory_space<vmem>>, vector<8x256xf32>,
    %c240_i32_47 = arith.constant 240 : i32
    %123 = tpu.dynamic_rotate %97 by %c240_i32_47 dim 1 : vector<8x256xf32>, i32 -> vector<8x256xf32>
    %124 = vector.broadcast %55 : vector<1x256xf32> to vector<8x256xf32>
    %125 = arith.mulf %123, %124 : vector<8x256xf32>
    %c56 = arith.constant 56 : index
    %c0_48 = arith.constant 0 : index
    %126 = vector.load %arg21[%c56, %c0_48] : memref<72x256xf32, #tpu.memory_space<vmem>>, vector<8x256xf32>
    tpu.vector_store %arg21[%c56, %c0_48], %125 {strides = array<i32>} : memref<72x256xf32, #tpu.memory_space<vmem>>, vector<8x256xf32>,
    %c239_i32 = arith.constant 239 : i32
    %127 = tpu.dynamic_rotate %97 by %c239_i32 dim 1 : vector<8x256xf32>, i32 -> vector<8x256xf32>
    %128 = vector.broadcast %62 : vector<1x256xf32> to vector<8x256xf32>
    %129 = arith.mulf %127, %128 : vector<8x256xf32>
    %c64 = arith.constant 64 : index
    %c0_49 = arith.constant 0 : index
    %130 = vector.load %arg21[%c64, %c0_49] : memref<72x256xf32, #tpu.memory_space<vmem>>, vector<8x256xf32>
    tpu.vector_store %arg21[%c64, %c0_49], %129 {strides = array<i32>} : memref<72x256xf32, #tpu.memory_space<vmem>>, vector<8x256xf32>,
    %c0_50 = arith.constant 0 : index
    %c0_51 = arith.constant 0 : index
    %c0_52 = arith.constant 0 : index
    %131 = vector.load %arg8[%c0_50, %c0_51, %c0_52] : memref<2x8x72xf32, #tpu.memory_space<vmem>>, vector<1x8x72xf32>
    %132 = vector.shape_cast %131 : vector<1x8x72xf32> to vector<8x72xf32>
    %c0_53 = arith.constant 0 : index
    %c0_54 = arith.constant 0 : index
    %133 = vector.load %arg21[%c0_53, %c0_54] : memref<72x256xf32, #tpu.memory_space<vmem>>, vector<72x256xf32>
    %cst_55 = arith.constant dense<0.000000e+00> : vector<8x256xf32>
    %134 = tpu.matmul %132, %133, %cst_55 {dimension_numbers = #tpu.dot_dimension_numbers<[1], [0], [0], [1], [0, 0, 1, 1], [], []>} : vector<8x72xf32>, vector<72x256xf32>, vector<8x256xf32> -> vector<8x256xf32>
    %c0_56 = arith.constant 0 : index
    %c0_57 = arith.constant 0 : index
    %c0_58 = arith.constant 0 : index
    %135 = vector.load %arg9[%c0_56, %c0_57, %c0_58] : memref<2x8x1xf32, #tpu.memory_space<vmem>>, vector<1x8x1xf32>
    %136 = vector.shape_cast %135 : vector<1x8x1xf32> to vector<8x1xf32>
    %137 = vector.broadcast %136 : vector<8x1xf32> to vector<8x256xf32>
    %138 = arith.mulf %134, %137 : vector<8x256xf32>
    %c0_59 = arith.constant 0 : index
    %c0_60 = arith.constant 0 : index
    %c0_61 = arith.constant 0 : index
    %139 = vector.load %arg10[%c0_59, %c0_60, %c0_61] : memref<2x8x1xf32, #tpu.memory_space<vmem>>, vector<1x8x1xf32>
    %140 = vector.shape_cast %139 : vector<1x8x1xf32> to vector<8x1xf32>
    %141 = vector.broadcast %140 : vector<8x1xf32> to vector<8x256xf32>
    %142 = arith.addf %138, %141 : vector<8x256xf32>
    %cst_62 = arith.constant 0.000000e+00 : f32
    %143 = vector.broadcast %cst_62 : f32 to vector<8x256xf32>
    %144 = arith.subf %143, %142 : vector<8x256xf32>
    %145 = math.exp %144 : vector<8x256xf32>
    %cst_63 = arith.constant 1.000000e+00 : f32
    %146 = vector.broadcast %cst_63 : f32 to vector<8x256xf32>
    %147 = arith.addf %146, %145 : vector<8x256xf32>
    %cst_64 = arith.constant 1.000000e+00 : f32
    %148 = vector.broadcast %cst_64 : f32 to vector<8x256xf32>
    %149 = arith.divf %148, %147 : vector<8x256xf32>
    %150 = arith.mulf %142, %149 : vector<8x256xf32>
    %151 = arith.addf %78, %150 : vector<8x256xf32>
    %c1 = arith.constant 1 : index
    %c0_65 = arith.constant 0 : index
    %c0_66 = arith.constant 0 : index
    %152 = vector.load %arg5[%c1, %c0_65, %c0_66] : memref<2x8x8xf32, #tpu.memory_space<vmem>>, vector<1x8x8xf32>
    %153 = vector.shape_cast %152 : vector<1x8x8xf32> to vector<8x8xf32>
    %cst_67 = arith.constant dense<0.000000e+00> : vector<8x256xf32>
    %154 = tpu.matmul %153, %151, %cst_67 {dimension_numbers = #tpu.dot_dimension_numbers<[1], [0], [0], [1], [0, 0, 1, 1], [], []>} : vector<8x8xf32>, vector<8x256xf32>, vector<8x256xf32> -> vector<8x256xf32>
    %c1_68 = arith.constant 1 : index
    %c0_69 = arith.constant 0 : index
    %c0_70 = arith.constant 0 : index
    %155 = vector.load %arg6[%c1_68, %c0_69, %c0_70] : memref<2x8x1xf32, #tpu.memory_space<vmem>>, vector<1x8x1xf32>
    %156 = vector.shape_cast %155 : vector<1x8x1xf32> to vector<8x1xf32>
    %157 = vector.broadcast %156 : vector<8x1xf32> to vector<8x256xf32>
    %158 = arith.mulf %154, %157 : vector<8x256xf32>
    %c1_71 = arith.constant 1 : index
    %c0_72 = arith.constant 0 : index
    %c0_73 = arith.constant 0 : index
    %159 = vector.load %arg7[%c1_71, %c0_72, %c0_73] : memref<2x8x1xf32, #tpu.memory_space<vmem>>, vector<1x8x1xf32>
    %160 = vector.shape_cast %159 : vector<1x8x1xf32> to vector<8x1xf32>
    %161 = vector.broadcast %160 : vector<8x1xf32> to vector<8x256xf32>
    %162 = arith.addf %158, %161 : vector<8x256xf32>
    %cst_74 = arith.constant 0.000000e+00 : f32
    %163 = vector.broadcast %cst_74 : f32 to vector<8x256xf32>
    %164 = arith.subf %163, %162 : vector<8x256xf32>
    %165 = math.exp %164 : vector<8x256xf32>
    %cst_75 = arith.constant 1.000000e+00 : f32
    %166 = vector.broadcast %cst_75 : f32 to vector<8x256xf32>
    %167 = arith.addf %166, %165 : vector<8x256xf32>
    %cst_76 = arith.constant 1.000000e+00 : f32
    %168 = vector.broadcast %cst_76 : f32 to vector<8x256xf32>
    %169 = arith.divf %168, %167 : vector<8x256xf32>
    %170 = arith.mulf %162, %169 : vector<8x256xf32>
    %c17_i32_77 = arith.constant 17 : i32
    %171 = tpu.dynamic_rotate %170 by %c17_i32_77 dim 1 : vector<8x256xf32>, i32 -> vector<8x256xf32>
    %172 = vector.broadcast %25 : vector<1x256xf32> to vector<8x256xf32>
    %173 = arith.mulf %171, %172 : vector<8x256xf32>
    %c0_78 = arith.constant 0 : index
    %c0_79 = arith.constant 0 : index
    %174 = vector.load %arg21[%c0_78, %c0_79] : memref<72x256xf32, #tpu.memory_space<vmem>>, vector<8x256xf32>
    tpu.vector_store %arg21[%c0_78, %c0_79], %173 {strides = array<i32>} : memref<72x256xf32, #tpu.memory_space<vmem>>, vector<8x256xf32>,
    %c16_i32_80 = arith.constant 16 : i32
    %175 = tpu.dynamic_rotate %170 by %c16_i32_80 dim 1 : vector<8x256xf32>, i32 -> vector<8x256xf32>
    %176 = vector.broadcast %29 : vector<1x256xf32> to vector<8x256xf32>
    %177 = arith.mulf %175, %176 : vector<8x256xf32>
    %c8_81 = arith.constant 8 : index
    %c0_82 = arith.constant 0 : index
    %178 = vector.load %arg21[%c8_81, %c0_82] : memref<72x256xf32, #tpu.memory_space<vmem>>, vector<8x256xf32>
    tpu.vector_store %arg21[%c8_81, %c0_82], %177 {strides = array<i32>} : memref<72x256xf32, #tpu.memory_space<vmem>>, vector<8x256xf32>,
    %c15_i32_83 = arith.constant 15 : i32
    %179 = tpu.dynamic_rotate %170 by %c15_i32_83 dim 1 : vector<8x256xf32>, i32 -> vector<8x256xf32>
    %180 = vector.broadcast %36 : vector<1x256xf32> to vector<8x256xf32>
    %181 = arith.mulf %179, %180 : vector<8x256xf32>
    %c16_84 = arith.constant 16 : index
    %c0_85 = arith.constant 0 : index
    %182 = vector.load %arg21[%c16_84, %c0_85] : memref<72x256xf32, #tpu.memory_space<vmem>>, vector<8x256xf32>
    tpu.vector_store %arg21[%c16_84, %c0_85], %181 {strides = array<i32>} : memref<72x256xf32, #tpu.memory_space<vmem>>, vector<8x256xf32>,
    %c1_i32_86 = arith.constant 1 : i32
    %183 = tpu.dynamic_rotate %170 by %c1_i32_86 dim 1 : vector<8x256xf32>, i32 -> vector<8x256xf32>
    %184 = vector.broadcast %40 : vector<1x256xf32> to vector<8x256xf32>
    %185 = arith.mulf %183, %184 : vector<8x256xf32>
    %c24_87 = arith.constant 24 : index
    %c0_88 = arith.constant 0 : index
    %186 = vector.load %arg21[%c24_87, %c0_88] : memref<72x256xf32, #tpu.memory_space<vmem>>, vector<8x256xf32>
    tpu.vector_store %arg21[%c24_87, %c0_88], %185 {strides = array<i32>} : memref<72x256xf32, #tpu.memory_space<vmem>>, vector<8x256xf32>,
    %c32_89 = arith.constant 32 : index
    %c0_90 = arith.constant 0 : index
    %187 = vector.load %arg21[%c32_89, %c0_90] : memref<72x256xf32, #tpu.memory_space<vmem>>, vector<8x256xf32>
    tpu.vector_store %arg21[%c32_89, %c0_90], %170 {strides = array<i32>} : memref<72x256xf32, #tpu.memory_space<vmem>>, vector<8x256xf32>,
    %c255_i32_91 = arith.constant 255 : i32
    %188 = tpu.dynamic_rotate %170 by %c255_i32_91 dim 1 : vector<8x256xf32>, i32 -> vector<8x256xf32>
    %189 = vector.broadcast %44 : vector<1x256xf32> to vector<8x256xf32>
    %190 = arith.mulf %188, %189 : vector<8x256xf32>
    %c40_92 = arith.constant 40 : index
    %c0_93 = arith.constant 0 : index
    %191 = vector.load %arg21[%c40_92, %c0_93] : memref<72x256xf32, #tpu.memory_space<vmem>>, vector<8x256xf32>
    tpu.vector_store %arg21[%c40_92, %c0_93], %190 {strides = array<i32>} : memref<72x256xf32, #tpu.memory_space<vmem>>, vector<8x256xf32>,
    %c241_i32_94 = arith.constant 241 : i32
    %192 = tpu.dynamic_rotate %170 by %c241_i32_94 dim 1 : vector<8x256xf32>, i32 -> vector<8x256xf32>
    %193 = vector.broadcast %51 : vector<1x256xf32> to vector<8x256xf32>
    %194 = arith.mulf %192, %193 : vector<8x256xf32>
    %c48_95 = arith.constant 48 : index
    %c0_96 = arith.constant 0 : index
    %195 = vector.load %arg21[%c48_95, %c0_96] : memref<72x256xf32, #tpu.memory_space<vmem>>, vector<8x256xf32>
    tpu.vector_store %arg21[%c48_95, %c0_96], %194 {strides = array<i32>} : memref<72x256xf32, #tpu.memory_space<vmem>>, vector<8x256xf32>,
    %c240_i32_97 = arith.constant 240 : i32
    %196 = tpu.dynamic_rotate %170 by %c240_i32_97 dim 1 : vector<8x256xf32>, i32 -> vector<8x256xf32>
    %197 = vector.broadcast %55 : vector<1x256xf32> to vector<8x256xf32>
    %198 = arith.mulf %196, %197 : vector<8x256xf32>
    %c56_98 = arith.constant 56 : index
    %c0_99 = arith.constant 0 : index
    %199 = vector.load %arg21[%c56_98, %c0_99] : memref<72x256xf32, #tpu.memory_space<vmem>>, vector<8x256xf32>
    tpu.vector_store %arg21[%c56_98, %c0_99], %198 {strides = array<i32>} : memref<72x256xf32, #tpu.memory_space<vmem>>, vector<8x256xf32>,
    %c239_i32_100 = arith.constant 239 : i32
    %200 = tpu.dynamic_rotate %170 by %c239_i32_100 dim 1 : vector<8x256xf32>, i32 -> vector<8x256xf32>
    %201 = vector.broadcast %62 : vector<1x256xf32> to vector<8x256xf32>
    %202 = arith.mulf %200, %201 : vector<8x256xf32>
    %c64_101 = arith.constant 64 : index
    %c0_102 = arith.constant 0 : index
    %203 = vector.load %arg21[%c64_101, %c0_102] : memref<72x256xf32, #tpu.memory_space<vmem>>, vector<8x256xf32>
    tpu.vector_store %arg21[%c64_101, %c0_102], %202 {strides = array<i32>} : memref<72x256xf32, #tpu.memory_space<vmem>>, vector<8x256xf32>,
    %c1_103 = arith.constant 1 : index
    %c0_104 = arith.constant 0 : index
    %c0_105 = arith.constant 0 : index
    %204 = vector.load %arg8[%c1_103, %c0_104, %c0_105] : memref<2x8x72xf32, #tpu.memory_space<vmem>>, vector<1x8x72xf32>
    %205 = vector.shape_cast %204 : vector<1x8x72xf32> to vector<8x72xf32>
    %c0_106 = arith.constant 0 : index
    %c0_107 = arith.constant 0 : index
    %206 = vector.load %arg21[%c0_106, %c0_107] : memref<72x256xf32, #tpu.memory_space<vmem>>, vector<72x256xf32>
    %cst_108 = arith.constant dense<0.000000e+00> : vector<8x256xf32>
    %207 = tpu.matmul %205, %206, %cst_108 {dimension_numbers = #tpu.dot_dimension_numbers<[1], [0], [0], [1], [0, 0, 1, 1], [], []>} : vector<8x72xf32>, vector<72x256xf32>, vector<8x256xf32> -> vector<8x256xf32>
    %c1_109 = arith.constant 1 : index
    %c0_110 = arith.constant 0 : index
    %c0_111 = arith.constant 0 : index
    %208 = vector.load %arg9[%c1_109, %c0_110, %c0_111] : memref<2x8x1xf32, #tpu.memory_space<vmem>>, vector<1x8x1xf32>
    %209 = vector.shape_cast %208 : vector<1x8x1xf32> to vector<8x1xf32>
    %210 = vector.broadcast %209 : vector<8x1xf32> to vector<8x256xf32>
    %211 = arith.mulf %207, %210 : vector<8x256xf32>
    %c1_112 = arith.constant 1 : index
    %c0_113 = arith.constant 0 : index
    %c0_114 = arith.constant 0 : index
    %212 = vector.load %arg10[%c1_112, %c0_113, %c0_114] : memref<2x8x1xf32, #tpu.memory_space<vmem>>, vector<1x8x1xf32>
    %213 = vector.shape_cast %212 : vector<1x8x1xf32> to vector<8x1xf32>
    %214 = vector.broadcast %213 : vector<8x1xf32> to vector<8x256xf32>
    %215 = arith.addf %211, %214 : vector<8x256xf32>
    %cst_115 = arith.constant 0.000000e+00 : f32
    %216 = vector.broadcast %cst_115 : f32 to vector<8x256xf32>
    %217 = arith.subf %216, %215 : vector<8x256xf32>
    %218 = math.exp %217 : vector<8x256xf32>
    %cst_116 = arith.constant 1.000000e+00 : f32
    %219 = vector.broadcast %cst_116 : f32 to vector<8x256xf32>
    %220 = arith.addf %219, %218 : vector<8x256xf32>
    %cst_117 = arith.constant 1.000000e+00 : f32
    %221 = vector.broadcast %cst_117 : f32 to vector<8x256xf32>
    %222 = arith.divf %221, %220 : vector<8x256xf32>
    %223 = arith.mulf %215, %222 : vector<8x256xf32>
    %224 = arith.addf %151, %223 : vector<8x256xf32>
    %c0_118 = arith.constant 0 : index
    %c0_119 = arith.constant 0 : index
    %225 = vector.load %arg11[%c0_118, %c0_119] : memref<8x8xf32, #tpu.memory_space<vmem>>, vector<8x8xf32>
    %cst_120 = arith.constant dense<0.000000e+00> : vector<8x256xf32>
    %226 = tpu.matmul %225, %224, %cst_120 {dimension_numbers = #tpu.dot_dimension_numbers<[1], [0], [0], [1], [0, 0, 1, 1], [], []>} : vector<8x8xf32>, vector<8x256xf32>, vector<8x256xf32> -> vector<8x256xf32>
    %c0_121 = arith.constant 0 : index
    %c0_122 = arith.constant 0 : index
    %227 = vector.load %arg13[%c0_121, %c0_122] : memref<8x1xf32, #tpu.memory_space<vmem>>, vector<8x1xf32>
    %228 = vector.broadcast %227 : vector<8x1xf32> to vector<8x256xf32>
    %229 = arith.mulf %226, %228 : vector<8x256xf32>
    %c0_123 = arith.constant 0 : index
    %c0_124 = arith.constant 0 : index
    %230 = vector.load %arg14[%c0_123, %c0_124] : memref<8x1xf32, #tpu.memory_space<vmem>>, vector<8x1xf32>
    %231 = vector.broadcast %230 : vector<8x1xf32> to vector<8x256xf32>
    %232 = arith.addf %229, %231 : vector<8x256xf32>
    %cst_125 = arith.constant 0.000000e+00 : f32
    %233 = vector.broadcast %cst_125 : f32 to vector<8x256xf32>
    %234 = arith.cmpf oge, %232, %233 : vector<8x256xf32>
    %cst_126 = arith.constant 1.000000e-01 : f32
    %235 = vector.broadcast %cst_126 : f32 to vector<8x256xf32>
    %236 = arith.mulf %235, %232 : vector<8x256xf32>
    %237 = arith.select %234, %232, %236 : vector<8x256xi1>, vector<8x256xf32>
    %c0_127 = arith.constant 0 : index
    %c0_128 = arith.constant 0 : index
    %238 = vector.load %arg12[%c0_127, %c0_128] : memref<8x4xf32, #tpu.memory_space<vmem>>, vector<8x4xf32>
    %cst_129 = arith.constant dense<0.000000e+00> : vector<8x256xf32>
    %239 = tpu.matmul %238, %1, %cst_129 {dimension_numbers = #tpu.dot_dimension_numbers<[1], [0], [0], [1], [0, 0, 1, 1], [], []>} : vector<8x4xf32>, vector<4x256xf32>, vector<8x256xf32> -> vector<8x256xf32>
    %c0_130 = arith.constant 0 : index
    %c0_131 = arith.constant 0 : index
    %240 = vector.load %arg15[%c0_130, %c0_131] : memref<8x1xf32, #tpu.memory_space<vmem>>, vector<8x1xf32>
    %241 = vector.broadcast %240 : vector<8x1xf32> to vector<8x256xf32>
    %242 = arith.mulf %239, %241 : vector<8x256xf32>
    %c0_132 = arith.constant 0 : index
    %c0_133 = arith.constant 0 : index
    %243 = vector.load %arg16[%c0_132, %c0_133] : memref<8x1xf32, #tpu.memory_space<vmem>>, vector<8x1xf32>
    %244 = vector.broadcast %243 : vector<8x1xf32> to vector<8x256xf32>
    %245 = arith.addf %242, %244 : vector<8x256xf32>
    %cst_134 = arith.constant 0.000000e+00 : f32
    %246 = vector.broadcast %cst_134 : f32 to vector<8x256xf32>
    %247 = arith.cmpf oge, %245, %246 : vector<8x256xf32>
    %cst_135 = arith.constant 1.000000e-01 : f32
    %248 = vector.broadcast %cst_135 : f32 to vector<8x256xf32>
    %249 = arith.mulf %248, %245 : vector<8x256xf32>
    %250 = arith.select %247, %245, %249 : vector<8x256xi1>, vector<8x256xf32>
    %251 = tpu.concatenate %237, %250 in 0 : vector<8x256xf32>, vector<8x256xf32> -> vector<16x256xf32>
    %c0_136 = arith.constant 0 : index
    %c0_137 = arith.constant 0 : index
    %252 = vector.load %arg17[%c0_136, %c0_137] : memref<8x16xf32, #tpu.memory_space<vmem>>, vector<8x16xf32>
    %cst_138 = arith.constant dense<0.000000e+00> : vector<8x256xf32>
    %253 = tpu.matmul %252, %251, %cst_138 {dimension_numbers = #tpu.dot_dimension_numbers<[1], [0], [0], [1], [0, 0, 1, 1], [], []>} : vector<8x16xf32>, vector<16x256xf32>, vector<8x256xf32> -> vector<8x256xf32>
    %c0_139 = arith.constant 0 : index
    %c0_140 = arith.constant 0 : index
    %254 = vector.load %arg18[%c0_139, %c0_140] : memref<8x1xf32, #tpu.memory_space<vmem>>, vector<8x1xf32>
    %255 = vector.broadcast %254 : vector<8x1xf32> to vector<8x256xf32>
    %256 = arith.mulf %253, %255 : vector<8x256xf32>
    %c0_141 = arith.constant 0 : index
    %c0_142 = arith.constant 0 : index
    %257 = vector.load %arg19[%c0_141, %c0_142] : memref<8x1xf32, #tpu.memory_space<vmem>>, vector<8x1xf32>
    %258 = vector.broadcast %257 : vector<8x1xf32> to vector<8x256xf32>
    %259 = arith.addf %256, %258 : vector<8x256xf32>
    %cst_143 = arith.constant 0.000000e+00 : f32
    %260 = vector.broadcast %cst_143 : f32 to vector<8x256xf32>
    %261 = arith.subf %260, %259 : vector<8x256xf32>
    %262 = math.exp %261 : vector<8x256xf32>
    %cst_144 = arith.constant 1.000000e+00 : f32
    %263 = vector.broadcast %cst_144 : f32 to vector<8x256xf32>
    %264 = arith.addf %263, %262 : vector<8x256xf32>
    %cst_145 = arith.constant 1.000000e+00 : f32
    %265 = vector.broadcast %cst_145 : f32 to vector<8x256xf32>
    %266 = arith.divf %265, %264 : vector<8x256xf32>
    %267 = arith.mulf %259, %266 : vector<8x256xf32>
    %c0_146 = arith.constant 0 : index
    %c0_147 = arith.constant 0 : index
    %c0_148 = arith.constant 0 : index
    %268 = vector.load %arg20[%c0_146, %c0_147, %c0_148] : memref<1x8x256xf32, #tpu.memory_space<vmem>>, vector<1x8x256xf32>
    %269 = vector.shape_cast %268 : vector<1x8x256xf32> to vector<8x256xf32>
    %270 = vector.shape_cast %267 : vector<8x256xf32> to vector<1x8x256xf32>
    tpu.vector_store %arg20[%c0_146, %c0_147, %c0_148], %270 {strides = array<i32>} : memref<1x8x256xf32, #tpu.memory_space<vmem>>, vector<1x8x256xf32>,
    return
  }
  func.func @transform_0(%arg0: i32) -> (i32, i32, i32) {
    %c0_i32 = arith.constant 0 : i32
    %c0_i32_0 = arith.constant 0 : i32
    %c0_i32_1 = arith.constant 0 : i32
    return %arg0, %c0_i32, %c0_i32_0 : i32, i32, i32
  }
  func.func @transform_1(%arg0: i32) -> (i32, i32) {
    %c0_i32 = arith.constant 0 : i32
    %c0_i32_0 = arith.constant 0 : i32
    %c0_i32_1 = arith.constant 0 : i32
    return %c0_i32, %c0_i32_0 : i32, i32
  }
  func.func @transform_2(%arg0: i32) -> (i32, i32) {
    %c0_i32 = arith.constant 0 : i32
    %c0_i32_0 = arith.constant 0 : i32
    %c0_i32_1 = arith.constant 0 : i32
    return %c0_i32, %c0_i32_0 : i32, i32
  }
  func.func @transform_3(%arg0: i32) -> (i32, i32) {
    %c0_i32 = arith.constant 0 : i32
    %c0_i32_0 = arith.constant 0 : i32
    %c0_i32_1 = arith.constant 0 : i32
    return %c0_i32, %c0_i32_0 : i32, i32
  }
  func.func @transform_4(%arg0: i32) -> (i32, i32, i32) {
    %c0_i32 = arith.constant 0 : i32
    %c0_i32_0 = arith.constant 0 : i32
    %c0_i32_1 = arith.constant 0 : i32
    %c0_i32_2 = arith.constant 0 : i32
    return %c0_i32, %c0_i32_0, %c0_i32_1 : i32, i32, i32
  }
  func.func @transform_5(%arg0: i32) -> (i32, i32, i32) {
    %c0_i32 = arith.constant 0 : i32
    %c0_i32_0 = arith.constant 0 : i32
    %c0_i32_1 = arith.constant 0 : i32
    %c0_i32_2 = arith.constant 0 : i32
    return %c0_i32, %c0_i32_0, %c0_i32_1 : i32, i32, i32
  }
  func.func @transform_6(%arg0: i32) -> (i32, i32, i32) {
    %c0_i32 = arith.constant 0 : i32
    %c0_i32_0 = arith.constant 0 : i32
    %c0_i32_1 = arith.constant 0 : i32
    %c0_i32_2 = arith.constant 0 : i32
    return %c0_i32, %c0_i32_0, %c0_i32_1 : i32, i32, i32
  }
  func.func @transform_7(%arg0: i32) -> (i32, i32, i32) {
    %c0_i32 = arith.constant 0 : i32
    %c0_i32_0 = arith.constant 0 : i32
    %c0_i32_1 = arith.constant 0 : i32
    %c0_i32_2 = arith.constant 0 : i32
    return %c0_i32, %c0_i32_0, %c0_i32_1 : i32, i32, i32
  }
  func.func @transform_8(%arg0: i32) -> (i32, i32, i32) {
    %c0_i32 = arith.constant 0 : i32
    %c0_i32_0 = arith.constant 0 : i32
    %c0_i32_1 = arith.constant 0 : i32
    %c0_i32_2 = arith.constant 0 : i32
    return %c0_i32, %c0_i32_0, %c0_i32_1 : i32, i32, i32
  }
  func.func @transform_9(%arg0: i32) -> (i32, i32, i32) {
    %c0_i32 = arith.constant 0 : i32
    %c0_i32_0 = arith.constant 0 : i32
    %c0_i32_1 = arith.constant 0 : i32
    %c0_i32_2 = arith.constant 0 : i32
    return %c0_i32, %c0_i32_0, %c0_i32_1 : i32, i32, i32
  }
  func.func @transform_10(%arg0: i32) -> (i32, i32) {
    %c0_i32 = arith.constant 0 : i32
    %c0_i32_0 = arith.constant 0 : i32
    %c0_i32_1 = arith.constant 0 : i32
    return %c0_i32, %c0_i32_0 : i32, i32
  }
  func.func @transform_11(%arg0: i32) -> (i32, i32) {
    %c0_i32 = arith.constant 0 : i32
    %c0_i32_0 = arith.constant 0 : i32
    %c0_i32_1 = arith.constant 0 : i32
    return %c0_i32, %c0_i32_0 : i32, i32
  }
  func.func @transform_12(%arg0: i32) -> (i32, i32) {
    %c0_i32 = arith.constant 0 : i32
    %c0_i32_0 = arith.constant 0 : i32
    %c0_i32_1 = arith.constant 0 : i32
    return %c0_i32, %c0_i32_0 : i32, i32
  }
  func.func @transform_13(%arg0: i32) -> (i32, i32) {
    %c0_i32 = arith.constant 0 : i32
    %c0_i32_0 = arith.constant 0 : i32
    %c0_i32_1 = arith.constant 0 : i32
    return %c0_i32, %c0_i32_0 : i32, i32
  }
  func.func @transform_14(%arg0: i32) -> (i32, i32) {
    %c0_i32 = arith.constant 0 : i32
    %c0_i32_0 = arith.constant 0 : i32
    %c0_i32_1 = arith.constant 0 : i32
    return %c0_i32, %c0_i32_0 : i32, i32
  }
  func.func @transform_15(%arg0: i32) -> (i32, i32) {
    %c0_i32 = arith.constant 0 : i32
    %c0_i32_0 = arith.constant 0 : i32
    %c0_i32_1 = arith.constant 0 : i32
    return %c0_i32, %c0_i32_0 : i32, i32
  }
  func.func @transform_16(%arg0: i32) -> (i32, i32) {
    %c0_i32 = arith.constant 0 : i32
    %c0_i32_0 = arith.constant 0 : i32
    %c0_i32_1 = arith.constant 0 : i32
    return %c0_i32, %c0_i32_0 : i32, i32
  }
  func.func @transform_17(%arg0: i32) -> (i32, i32) {
    %c0_i32 = arith.constant 0 : i32
    %c0_i32_0 = arith.constant 0 : i32
    %c0_i32_1 = arith.constant 0 : i32
    return %c0_i32, %c0_i32_0 : i32, i32
  }
  func.func @transform_18(%arg0: i32) -> (i32, i32) {
    %c0_i32 = arith.constant 0 : i32
    %c0_i32_0 = arith.constant 0 : i32
    %c0_i32_1 = arith.constant 0 : i32
    return %c0_i32, %c0_i32_0 : i32, i32
  }
  func.func @transform_19(%arg0: i32) -> (i32, i32, i32) {
    %c0_i32 = arith.constant 0 : i32
    %c0_i32_0 = arith.constant 0 : i32
    %c0_i32_1 = arith.constant 0 : i32
    return %arg0, %c0_i32, %c0_i32_0 : i32, i32, i32
  }
}

</mosaic_0001>

<llo_original>
// kernel: tpu_custom_call.1
$region0: #{tpu_custom_call.1}
  #allocation0 [shape = 'u32[]', space=smem, size = 0x4, offset = 0x4, fixed_abs, tag = 'smem constant byte address 0x4 - core index']
  #allocation1 [shape = 'u32[72,128]{1,0:T(1,128)}', space=vmem, size = 0x9000, scoped, tag = 'internal scratch']
  #allocation2 [shape = 'f32[72,256]{1,0:T(8,128)}', space=vmem, size = 0x12000, scoped, tag = 'scratch operand']
  %s0 = inlined_call_operand.vmem [shape: f32[2,4,256], index: 0, kind: input, shape index: {}]
  %s1 = inlined_call_operand.vmem [shape: f32[8,4], index: 1, kind: input, shape index: {}]
  %s2 = inlined_call_operand.vmem [shape: f32[8,1], index: 2, kind: input, shape index: {}]
  %s3 = inlined_call_operand.vmem [shape: f32[8,1], index: 3, kind: input, shape index: {}]
  %s4 = inlined_call_operand.vmem [shape: f32[2,8,8], index: 4, kind: input, shape index: {}]
  %s5 = inlined_call_operand.vmem [shape: f32[2,8,1], index: 5, kind: input, shape index: {}]
  %s6 = inlined_call_operand.vmem [shape: f32[2,8,1], index: 6, kind: input, shape index: {}]
  %s7 = inlined_call_operand.vmem [shape: f32[2,8,72], index: 7, kind: input, shape index: {}]
  %s8 = inlined_call_operand.vmem [shape: f32[2,8,1], index: 8, kind: input, shape index: {}]
  %s9 = inlined_call_operand.vmem [shape: f32[2,8,1], index: 9, kind: input, shape index: {}]
  %s10 = inlined_call_operand.vmem [shape: f32[8,8], index: 10, kind: input, shape index: {}]
  %s11 = inlined_call_operand.vmem [shape: f32[8,4], index: 11, kind: input, shape index: {}]
  %s12 = inlined_call_operand.vmem [shape: f32[8,1], index: 12, kind: input, shape index: {}]
  %s13 = inlined_call_operand.vmem [shape: f32[8,1], index: 13, kind: input, shape index: {}]
  %s14 = inlined_call_operand.vmem [shape: f32[8,1], index: 14, kind: input, shape index: {}]
  %s15 = inlined_call_operand.vmem [shape: f32[8,1], index: 15, kind: input, shape index: {}]
  %s16 = inlined_call_operand.vmem [shape: f32[8,16], index: 16, kind: input, shape index: {}]
  %s17 = inlined_call_operand.vmem [shape: f32[8,1], index: 17, kind: input, shape index: {}]
  %s18 = inlined_call_operand.vmem [shape: f32[8,1], index: 18, kind: input, shape index: {}]
  %s19 = inlined_call_operand.hbm [shape: f32[2,8,256], index: 19, kind: output, shape index: {}]
  %s20 = sld [smem:[#allocation0]]
  $region109: #{tpu_custom_call.1} parent=0
    _
  %s22 = ssub.s32 1, %s20
  %s23 = scalar_select 0, %s22, %s20
  $region1: #{tpu_custom_call.1} parent=0
    #allocation3 [shape = 'u8[16384]{0}', space=vmem, size = 0x4000, scoped, tag = 'output window, operand 0']
    #allocation4 [shape = 's32[2]{0}', space=sflag, size = 0x8, scoped, tag = 'scoped memory for tpu_custom_call.1']
    %24 = vsyncpa [#allocation4], 0
    %s25 = scalar_lea.sflag [#allocation4], 1
    %26 = vsyncpa %s25, 0
    loop: start=0, step=1, limit=4
    $region2: #{tpu_custom_call.1} parent=1 // loop_pre_header
      _
    $region3: #{tpu_custom_call.1} parent=1 // loop_header
      %s28 = sphi 0, %s32
      %p29 = scmp.ge.s32.totalorder %s28, 4
      %s38 = sphi 0, %s40
      %s41 = sphi 0, %s38
      %s42 = sphi 0, %s41
      %s58 = sphi 0, %s42
      %s62 = sphi 0, %s62
      %s64 = sphi 0, %s62
      %s65 = sphi 0, %s64
      %s79 = sphi 0, %s65
      %s83 = sphi 0, %s83
      %s85 = sphi 0, %s83
      %s86 = sphi 0, %s85
      %s100 = sphi 0, %s86
      %s104 = sphi 0, %s104
      %s106 = sphi 0, %s104
      %s107 = sphi 0, %s106
      %s121 = sphi 0, %s107
      %s125 = sphi 0, %s125
      %s127 = sphi 0, %s125
      %s128 = sphi 0, %s127
      %s142 = sphi 0, %s128
      %s146 = sphi 0, %s146
      %s148 = sphi 0, %s146
      %s149 = sphi 0, %s148
      %s163 = sphi 0, %s149
      %s167 = sphi 0, %s167
      %s169 = sphi 0, %s167
      %s170 = sphi 0, %s169
      %s184 = sphi 0, %s170
      %s188 = sphi 0, %s188
      %s190 = sphi 0, %s188
      %s191 = sphi 0, %s190
      %s205 = sphi 0, %s191
      %s209 = sphi 0, %s209
      %s211 = sphi 0, %s209
      %s212 = sphi 0, %s211
      %s226 = sphi 0, %s212
      %s230 = sphi 0, %s230
      %s232 = sphi 0, %s230
      %s233 = sphi 0, %s232
      %s247 = sphi 0, %s233
      %s251 = sphi 0, %s251
      %s253 = sphi 0, %s251
      %s254 = sphi 0, %s253
      %s268 = sphi 0, %s254
      %s272 = sphi 0, %s272
      %s274 = sphi 0, %s272
      %s275 = sphi 0, %s274
      %s289 = sphi 0, %s275
      %s293 = sphi 0, %s293
      %s295 = sphi 0, %s293
      %s296 = sphi 0, %s295
      %s310 = sphi 0, %s296
      %s314 = sphi 0, %s314
      %s316 = sphi 0, %s314
      %s317 = sphi 0, %s316
      %s331 = sphi 0, %s317
      %s335 = sphi 0, %s335
      %s337 = sphi 0, %s335
      %s338 = sphi 0, %s337
      %s352 = sphi 0, %s338
      %s356 = sphi 0, %s356
      %s358 = sphi 0, %s356
      %s359 = sphi 0, %s358
      %s373 = sphi 0, %s359
      %s377 = sphi 0, %s377
      %s379 = sphi 0, %s377
      %s380 = sphi 0, %s379
      %s394 = sphi 0, %s380
      %s398 = sphi 0, %s398
      %s400 = sphi 0, %s398
      %s401 = sphi 0, %s400
      %s415 = sphi 0, %s401
      %s419 = sphi 0, %s419
      %s421 = sphi 0, %s419
      %s422 = sphi 0, %s421
      %s436 = sphi 0, %s422
      %s442 = sphi 0, %s444
      %s445 = sphi 0, %s442
      %s446 = sphi 0, %s445
      %s462 = sphi 0, %s446
    $region4: #{tpu_custom_call.1} parent=1 // loop_header_branch
      %31 = sbr.rel (%p29) target = $region8
    $region5: #{tpu_custom_call.1} parent=1 // loop_body
      %s33 = ssub.s32 %s28, 1
      %s34 = ssub.s32 %s28, 2
      %s35 = sadd.s32 %s28, 1
      %s36 = ssub.s32 %s28, %s35
      %p37 = scmp.eq.s32.totalorder %s36, 0
      %s39 = sadd.s32 %s38, 1
      %s40 = scalar_select %p37, %s38, %s39
      %p43 = pneg %p37
      %p44 = scmp.eq.s32.totalorder %s28, 1
      %p45 = por %p43, %p44
      %p46 = scmp.ne.s32.totalorder %s38, %s41
      %p47 = scmp.eq.s32.totalorder %s28, 0
      %p48 = por %p46, %p47
      %p49 = scmp.ne.s32.totalorder %s38, %s41
      %p50 = scmp.eq.s32.totalorder %s33, 1
      %p51 = por %p49, %p50
      %p52 = scmp.ne.s32.totalorder %s41, %s42
      %p53 = scmp.eq.s32.totalorder %s33, 0
      %p54 = por %p52, %p53
      %p55 = scmp.ne.s32.totalorder %s41, %s42
      %p56 = scmp.eq.s32.totalorder %s34, 1
      %p57 = por %p55, %p56
      %p59 = scmp.ne.s32.totalorder %s42, %s58
      %p60 = scmp.eq.s32.totalorder %s34, 0
      %p61 = por %p59, %p60
      %s63 = sadd.s32 %s62, 1
      %p66 = scmp.eq.s32.totalorder %s28, 1
      %p67 = scmp.ne.s32.totalorder %s62, %s64
      %p68 = scmp.eq.s32.totalorder %s28, 0
      %p69 = por %p67, %p68
      %p70 = scmp.ne.s32.totalorder %s62, %s64
      %p71 = scmp.eq.s32.totalorder %s33, 1
      %p72 = por %p70, %p71
      %p73 = scmp.ne.s32.totalorder %s64, %s65
      %p74 = scmp.eq.s32.totalorder %s33, 0
      %p75 = por %p73, %p74
      %p76 = scmp.ne.s32.totalorder %s64, %s65
      %p77 = scmp.eq.s32.totalorder %s34, 1
      %p78 = por %p76, %p77
      %p80 = scmp.ne.s32.totalorder %s65, %s79
      %p81 = scmp.eq.s32.totalorder %s34, 0
      %p82 = por %p80, %p81
      %s84 = sadd.s32 %s83, 1
      %p87 = scmp.eq.s32.totalorder %s28, 1
      %p88 = scmp.ne.s32.totalorder %s83, %s85
      %p89 = scmp.eq.s32.totalorder %s28, 0
      %p90 = por %p88, %p89
      %p91 = scmp.ne.s32.totalorder %s83, %s85
      %p92 = scmp.eq.s32.totalorder %s33, 1
      %p93 = por %p91, %p92
      %p94 = scmp.ne.s32.totalorder %s85, %s86
      %p95 = scmp.eq.s32.totalorder %s33, 0
      %p96 = por %p94, %p95
      %p97 = scmp.ne.s32.totalorder %s85, %s86
      %p98 = scmp.eq.s32.totalorder %s34, 1
      %p99 = por %p97, %p98
      %p101 = scmp.ne.s32.totalorder %s86, %s100
      %p102 = scmp.eq.s32.totalorder %s34, 0
      %p103 = por %p101, %p102
      %s105 = sadd.s32 %s104, 1
      %p108 = scmp.eq.s32.totalorder %s28, 1
      %p109 = scmp.ne.s32.totalorder %s104, %s106
      %p110 = scmp.eq.s32.totalorder %s28, 0
      %p111 = por %p109, %p110
      %p112 = scmp.ne.s32.totalorder %s104, %s106
      %p113 = scmp.eq.s32.totalorder %s33, 1
      %p114 = por %p112, %p113
      %p115 = scmp.ne.s32.totalorder %s106, %s107
      %p116 = scmp.eq.s32.totalorder %s33, 0
      %p117 = por %p115, %p116
      %p118 = scmp.ne.s32.totalorder %s106, %s107
      %p119 = scmp.eq.s32.totalorder %s34, 1
      %p120 = por %p118, %p119
      %p122 = scmp.ne.s32.totalorder %s107, %s121
      %p123 = scmp.eq.s32.totalorder %s34, 0
      %p124 = por %p122, %p123
      %s126 = sadd.s32 %s125, 1
      %p129 = scmp.eq.s32.totalorder %s28, 1
      %p130 = scmp.ne.s32.totalorder %s125, %s127
      %p131 = scmp.eq.s32.totalorder %s28, 0
      %p132 = por %p130, %p131
      %p133 = scmp.ne.s32.totalorder %s125, %s127
      %p134 = scmp.eq.s32.totalorder %s33, 1
      %p135 = por %p133, %p134
      %p136 = scmp.ne.s32.totalorder %s127, %s128
      %p137 = scmp.eq.s32.totalorder %s33, 0
      %p138 = por %p136, %p137
      %p139 = scmp.ne.s32.totalorder %s127, %s128
      %p140 = scmp.eq.s32.totalorder %s34, 1
      %p141 = por %p139, %p140
      %p143 = scmp.ne.s32.totalorder %s128, %s142
      %p144 = scmp.eq.s32.totalorder %s34, 0
      %p145 = por %p143, %p144
      %s147 = sadd.s32 %s146, 1
      %p150 = scmp.eq.s32.totalorder %s28, 1
      %p151 = scmp.ne.s32.totalorder %s146, %s148
      %p152 = scmp.eq.s32.totalorder %s28, 0
      %p153 = por %p151, %p152
      %p154 = scmp.ne.s32.totalorder %s146, %s148
      %p155 = scmp.eq.s32.totalorder %s33, 1
      %p156 = por %p154, %p155
      %p157 = scmp.ne.s32.totalorder %s148, %s149
      %p158 = scmp.eq.s32.totalorder %s33, 0
      %p159 = por %p157, %p158
      %p160 = scmp.ne.s32.totalorder %s148, %s149
      %p161 = scmp.eq.s32.totalorder %s34, 1
      %p162 = por %p160, %p161
      %p164 = scmp.ne.s32.totalorder %s149, %s163
      %p165 = scmp.eq.s32.totalorder %s34, 0
      %p166 = por %p164, %p165
      %s168 = sadd.s32 %s167, 1
      %p171 = scmp.eq.s32.totalorder %s28, 1
      %p172 = scmp.ne.s32.totalorder %s167, %s169
      %p173 = scmp.eq.s32.totalorder %s28, 0
      %p174 = por %p172, %p173
      %p175 = scmp.ne.s32.totalorder %s167, %s169
      %p176 = scmp.eq.s32.totalorder %s33, 1
      %p177 = por %p175, %p176
      %p178 = scmp.ne.s32.totalorder %s169, %s170
      %p179 = scmp.eq.s32.totalorder %s33, 0
      %p180 = por %p178, %p179
      %p181 = scmp.ne.s32.totalorder %s169, %s170
      %p182 = scmp.eq.s32.totalorder %s34, 1
      %p183 = por %p181, %p182
      %p185 = scmp.ne.s32.totalorder %s170, %s184
      %p186 = scmp.eq.s32.totalorder %s34, 0
      %p187 = por %p185, %p186
      %s189 = sadd.s32 %s188, 1
      %p192 = scmp.eq.s32.totalorder %s28, 1
      %p193 = scmp.ne.s32.totalorder %s188, %s190
      %p194 = scmp.eq.s32.totalorder %s28, 0
      %p195 = por %p193, %p194
      %p196 = scmp.ne.s32.totalorder %s188, %s190
      %p197 = scmp.eq.s32.totalorder %s33, 1
      %p198 = por %p196, %p197
      %p199 = scmp.ne.s32.totalorder %s190, %s191
      %p200 = scmp.eq.s32.totalorder %s33, 0
      %p201 = por %p199, %p200
      %p202 = scmp.ne.s32.totalorder %s190, %s191
      %p203 = scmp.eq.s32.totalorder %s34, 1
      %p204 = por %p202, %p203
      %p206 = scmp.ne.s32.totalorder %s191, %s205
      %p207 = scmp.eq.s32.totalorder %s34, 0
      %p208 = por %p206, %p207
      %s210 = sadd.s32 %s209, 1
      %p213 = scmp.eq.s32.totalorder %s28, 1
      %p214 = scmp.ne.s32.totalorder %s209, %s211
      %p215 = scmp.eq.s32.totalorder %s28, 0
      %p216 = por %p214, %p215
      %p217 = scmp.ne.s32.totalorder %s209, %s211
      %p218 = scmp.eq.s32.totalorder %s33, 1
      %p219 = por %p217, %p218
      %p220 = scmp.ne.s32.totalorder %s211, %s212
      %p221 = scmp.eq.s32.totalorder %s33, 0
      %p222 = por %p220, %p221
      %p223 = scmp.ne.s32.totalorder %s211, %s212
      %p224 = scmp.eq.s32.totalorder %s34, 1
      %p225 = por %p223, %p224
      %p227 = scmp.ne.s32.totalorder %s212, %s226
      %p228 = scmp.eq.s32.totalorder %s34, 0
      %p229 = por %p227, %p228
      %s231 = sadd.s32 %s230, 1
      %p234 = scmp.eq.s32.totalorder %s28, 1
      %p235 = scmp.ne.s32.totalorder %s230, %s232
      %p236 = scmp.eq.s32.totalorder %s28, 0
      %p237 = por %p235, %p236
      %p238 = scmp.ne.s32.totalorder %s230, %s232
      %p239 = scmp.eq.s32.totalorder %s33, 1
      %p240 = por %p238, %p239
      %p241 = scmp.ne.s32.totalorder %s232, %s233
      %p242 = scmp.eq.s32.totalorder %s33, 0
      %p243 = por %p241, %p242
      %p244 = scmp.ne.s32.totalorder %s232, %s233
      %p245 = scmp.eq.s32.totalorder %s34, 1
      %p246 = por %p244, %p245
      %p248 = scmp.ne.s32.totalorder %s233, %s247
      %p249 = scmp.eq.s32.totalorder %s34, 0
      %p250 = por %p248, %p249
      %s252 = sadd.s32 %s251, 1
      %p255 = scmp.eq.s32.totalorder %s28, 1
      %p256 = scmp.ne.s32.totalorder %s251, %s253
      %p257 = scmp.eq.s32.totalorder %s28, 0
      %p258 = por %p256, %p257
      %p259 = scmp.ne.s32.totalorder %s251, %s253
      %p260 = scmp.eq.s32.totalorder %s33, 1
      %p261 = por %p259, %p260
      %p262 = scmp.ne.s32.totalorder %s253, %s254
      %p263 = scmp.eq.s32.totalorder %s33, 0
      %p264 = por %p262, %p263
      %p265 = scmp.ne.s32.totalorder %s253, %s254
      %p266 = scmp.eq.s32.totalorder %s34, 1
      %p267 = por %p265, %p266
      %p269 = scmp.ne.s32.totalorder %s254, %s268
      %p270 = scmp.eq.s32.totalorder %s34, 0
      %p271 = por %p269, %p270
      %s273 = sadd.s32 %s272, 1
      %p276 = scmp.eq.s32.totalorder %s28, 1
      %p277 = scmp.ne.s32.totalorder %s272, %s274
      %p278 = scmp.eq.s32.totalorder %s28, 0
      %p279 = por %p277, %p278
      %p280 = scmp.ne.s32.totalorder %s272, %s274
      %p281 = scmp.eq.s32.totalorder %s33, 1
      %p282 = por %p280, %p281
      %p283 = scmp.ne.s32.totalorder %s274, %s275
      %p284 = scmp.eq.s32.totalorder %s33, 0
      %p285 = por %p283, %p284
      %p286 = scmp.ne.s32.totalorder %s274, %s275
      %p287 = scmp.eq.s32.totalorder %s34, 1
      %p288 = por %p286, %p287
      %p290 = scmp.ne.s32.totalorder %s275, %s289
      %p291 = scmp.eq.s32.totalorder %s34, 0
      %p292 = por %p290, %p291
      %s294 = sadd.s32 %s293, 1
      %p297 = scmp.eq.s32.totalorder %s28, 1
      %p298 = scmp.ne.s32.totalorder %s293, %s295
      %p299 = scmp.eq.s32.totalorder %s28, 0
      %p300 = por %p298, %p299
      %p301 = scmp.ne.s32.totalorder %s293, %s295
      %p302 = scmp.eq.s32.totalorder %s33, 1
      %p303 = por %p301, %p302
      %p304 = scmp.ne.s32.totalorder %s295, %s296
      %p305 = scmp.eq.s32.totalorder %s33, 0
      %p306 = por %p304, %p305
      %p307 = scmp.ne.s32.totalorder %s295, %s296
      %p308 = scmp.eq.s32.totalorder %s34, 1
      %p309 = por %p307, %p308
      %p311 = scmp.ne.s32.totalorder %s296, %s310
      %p312 = scmp.eq.s32.totalorder %s34, 0
      %p313 = por %p311, %p312
      %s315 = sadd.s32 %s314, 1
      %p318 = scmp.eq.s32.totalorder %s28, 1
      %p319 = scmp.ne.s32.totalorder %s314, %s316
      %p320 = scmp.eq.s32.totalorder %s28, 0
      %p321 = por %p319, %p320
      %p322 = scmp.ne.s32.totalorder %s314, %s316
      %p323 = scmp.eq.s32.totalorder %s33, 1
      %p324 = por %p322, %p323
      %p325 = scmp.ne.s32.totalorder %s316, %s317
      %p326 = scmp.eq.s32.totalorder %s33, 0
      %p327 = por %p325, %p326
      %p328 = scmp.ne.s32.totalorder %s316, %s317
      %p329 = scmp.eq.s32.totalorder %s34, 1
      %p330 = por %p328, %p329
      %p332 = scmp.ne.s32.totalorder %s317, %s331
      %p333 = scmp.eq.s32.totalorder %s34, 0
      %p334 = por %p332, %p333
      %s336 = sadd.s32 %s335, 1
      %p339 = scmp.eq.s32.totalorder %s28, 1
      %p340 = scmp.ne.s32.totalorder %s335, %s337
      %p341 = scmp.eq.s32.totalorder %s28, 0
      %p342 = por %p340, %p341
      %p343 = scmp.ne.s32.totalorder %s335, %s337
      %p344 = scmp.eq.s32.totalorder %s33, 1
      %p345 = por %p343, %p344
      %p346 = scmp.ne.s32.totalorder %s337, %s338
      %p347 = scmp.eq.s32.totalorder %s33, 0
      %p348 = por %p346, %p347
      %p349 = scmp.ne.s32.totalorder %s337, %s338
      %p350 = scmp.eq.s32.totalorder %s34, 1
      %p351 = por %p349, %p350
      %p353 = scmp.ne.s32.totalorder %s338, %s352
      %p354 = scmp.eq.s32.totalorder %s34, 0
      %p355 = por %p353, %p354
      %s357 = sadd.s32 %s356, 1
      %p360 = scmp.eq.s32.totalorder %s28, 1
      %p361 = scmp.ne.s32.totalorder %s356, %s358
      %p362 = scmp.eq.s32.totalorder %s28, 0
      %p363 = por %p361, %p362
      %p364 = scmp.ne.s32.totalorder %s356, %s358
      %p365 = scmp.eq.s32.totalorder %s33, 1
      %p366 = por %p364, %p365
      %p367 = scmp.ne.s32.totalorder %s358, %s359
      %p368 = scmp.eq.s32.totalorder %s33, 0
      %p369 = por %p367, %p368
      %p370 = scmp.ne.s32.totalorder %s358, %s359
      %p371 = scmp.eq.s32.totalorder %s34, 1
      %p372 = por %p370, %p371
      %p374 = scmp.ne.s32.totalorder %s359, %s373
      %p375 = scmp.eq.s32.totalorder %s34, 0
      %p376 = por %p374, %p375
      %s378 = sadd.s32 %s377, 1
      %p381 = scmp.eq.s32.totalorder %s28, 1
      %p382 = scmp.ne.s32.totalorder %s377, %s379
      %p383 = scmp.eq.s32.totalorder %s28, 0
      %p384 = por %p382, %p383
      %p385 = scmp.ne.s32.totalorder %s377, %s379
      %p386 = scmp.eq.s32.totalorder %s33, 1
      %p387 = por %p385, %p386
      %p388 = scmp.ne.s32.totalorder %s379, %s380
      %p389 = scmp.eq.s32.totalorder %s33, 0
      %p390 = por %p388, %p389
      %p391 = scmp.ne.s32.totalorder %s379, %s380
      %p392 = scmp.eq.s32.totalorder %s34, 1
      %p393 = por %p391, %p392
      %p395 = scmp.ne.s32.totalorder %s380, %s394
      %p396 = scmp.eq.s32.totalorder %s34, 0
      %p397 = por %p395, %p396
      %s399 = sadd.s32 %s398, 1
      %p402 = scmp.eq.s32.totalorder %s28, 1
      %p403 = scmp.ne.s32.totalorder %s398, %s400
      %p404 = scmp.eq.s32.totalorder %s28, 0
      %p405 = por %p403, %p404
      %p406 = scmp.ne.s32.totalorder %s398, %s400
      %p407 = scmp.eq.s32.totalorder %s33, 1
      %p408 = por %p406, %p407
      %p409 = scmp.ne.s32.totalorder %s400, %s401
      %p410 = scmp.eq.s32.totalorder %s33, 0
      %p411 = por %p409, %p410
      %p412 = scmp.ne.s32.totalorder %s400, %s401
      %p413 = scmp.eq.s32.totalorder %s34, 1
      %p414 = por %p412, %p413
      %p416 = scmp.ne.s32.totalorder %s401, %s415
      %p417 = scmp.eq.s32.totalorder %s34, 0
      %p418 = por %p416, %p417
      %s420 = sadd.s32 %s419, 1
      %p423 = scmp.eq.s32.totalorder %s28, 1
      %p424 = scmp.ne.s32.totalorder %s419, %s421
      %p425 = scmp.eq.s32.totalorder %s28, 0
      %p426 = por %p424, %p425
      %p427 = scmp.ne.s32.totalorder %s419, %s421
      %p428 = scmp.eq.s32.totalorder %s33, 1
      %p429 = por %p427, %p428
      %p430 = scmp.ne.s32.totalorder %s421, %s422
      %p431 = scmp.eq.s32.totalorder %s33, 0
      %p432 = por %p430, %p431
      %p433 = scmp.ne.s32.totalorder %s421, %s422
      %p434 = scmp.eq.s32.totalorder %s34, 1
      %p435 = por %p433, %p434
      %p437 = scmp.ne.s32.totalorder %s422, %s436
      %p438 = scmp.eq.s32.totalorder %s34, 0
      %p439 = por %p437, %p438
      %s440 = ssub.s32 %s28, %s35
      %p441 = scmp.eq.s32.totalorder %s440, 0
      %s443 = sadd.s32 %s442, 1
      %s444 = scalar_select %p441, %s442, %s443
      %p447 = pneg %p441
      %p448 = scmp.eq.s32.totalorder %s28, 1
      %p449 = por %p447, %p448
      %p450 = scmp.ne.s32.totalorder %s442, %s445
      %p451 = scmp.eq.s32.totalorder %s28, 0
      %p452 = por %p450, %p451
      %p453 = scmp.ne.s32.totalorder %s442, %s445
      %p454 = scmp.eq.s32.totalorder %s33, 1
      %p455 = por %p453, %p454
      %p456 = scmp.ne.s32.totalorder %s445, %s446
      %p457 = scmp.eq.s32.totalorder %s33, 0
      %p458 = por %p456, %p457
      %p459 = scmp.ne.s32.totalorder %s445, %s446
      %p460 = scmp.eq.s32.totalorder %s34, 1
      %p461 = por %p459, %p460
      %p463 = scmp.ne.s32.totalorder %s446, %s462
      %p464 = scmp.eq.s32.totalorder %s34, 0
      %p465 = por %p463, %p464
      %p466 = scmp.le.s32.totalorder 1, %s28
      %p467 = scmp.lt.s32.totalorder %s28, 3
      %p468 = pnand %p466, %p467
      %p469 = pneg %p468
      // Predicated region
      $region9: #{tpu_custom_call.1} parent=5 // pred_check
        _
      $region10: #{tpu_custom_call.1} parent=5 // pred_check_branch
        %471 = sbr.rel (%p468) target = $region12
      $region11: #{tpu_custom_call.1} parent=5 // pred_region
        %s472 = ssub.s32 %s28, 1
        // Predicated region
        $region13: #{tpu_custom_call.1} parent=11 // pred_check
          %p473 = pneg %p75
        $region14: #{tpu_custom_call.1} parent=11 // pred_check_branch
          %475 = sbr.rel (%p473) target = $region16
        $region15: #{tpu_custom_call.1} parent=11 // pred_region
          _
        $region16: #{tpu_custom_call.1} parent=11 // pred_fallthru
          _
        // Predicated region
        $region17: #{tpu_custom_call.1} parent=11 // pred_check
          %p476 = pneg %p96
        $region18: #{tpu_custom_call.1} parent=11 // pred_check_branch
          %478 = sbr.rel (%p476) target = $region20
        $region19: #{tpu_custom_call.1} parent=11 // pred_region
          _
        $region20: #{tpu_custom_call.1} parent=11 // pred_fallthru
          _
        // Predicated region
        $region21: #{tpu_custom_call.1} parent=11 // pred_check
          %p479 = pneg %p117
        $region22: #{tpu_custom_call.1} parent=11 // pred_check_branch
          %481 = sbr.rel (%p479) target = $region24
        $region23: #{tpu_custom_call.1} parent=11 // pred_region
          _
        $region24: #{tpu_custom_call.1} parent=11 // pred_fallthru
          _
        // Predicated region
        $region25: #{tpu_custom_call.1} parent=11 // pred_check
          %p482 = pneg %p138
        $region26: #{tpu_custom_call.1} parent=11 // pred_check_branch
          %484 = sbr.rel (%p482) target = $region28
        $region27: #{tpu_custom_call.1} parent=11 // pred_region
          _
        $region28: #{tpu_custom_call.1} parent=11 // pred_fallthru
          _
        // Predicated region
        $region29: #{tpu_custom_call.1} parent=11 // pred_check
          %p485 = pneg %p159
        $region30: #{tpu_custom_call.1} parent=11 // pred_check_branch
          %487 = sbr.rel (%p485) target = $region32
        $region31: #{tpu_custom_call.1} parent=11 // pred_region
          _
        $region32: #{tpu_custom_call.1} parent=11 // pred_fallthru
          _
        // Predicated region
        $region33: #{tpu_custom_call.1} parent=11 // pred_check
          %p488 = pneg %p180
        $region34: #{tpu_custom_call.1} parent=11 // pred_check_branch
          %490 = sbr.rel (%p488) target = $region36
        $region35: #{tpu_custom_call.1} parent=11 // pred_region
          _
        $region36: #{tpu_custom_call.1} parent=11 // pred_fallthru
          _
        // Predicated region
        $region37: #{tpu_custom_call.1} parent=11 // pred_check
          %p491 = pneg %p201
        $region38: #{tpu_custom_call.1} parent=11 // pred_check_branch
          %493 = sbr.rel (%p491) target = $region40
        $region39: #{tpu_custom_call.1} parent=11 // pred_region
          _
        $region40: #{tpu_custom_call.1} parent=11 // pred_fallthru
          _
        // Predicated region
        $region41: #{tpu_custom_call.1} parent=11 // pred_check
          %p494 = pneg %p222
        $region42: #{tpu_custom_call.1} parent=11 // pred_check_branch
          %496 = sbr.rel (%p494) target = $region44
        $region43: #{tpu_custom_call.1} parent=11 // pred_region
          _
        $region44: #{tpu_custom_call.1} parent=11 // pred_fallthru
          _
        // Predicated region
        $region45: #{tpu_custom_call.1} parent=11 // pred_check
          %p497 = pneg %p243
        $region46: #{tpu_custom_call.1} parent=11 // pred_check_branch
          %499 = sbr.rel (%p497) target = $region48
        $region47: #{tpu_custom_call.1} parent=11 // pred_region
          _
        $region48: #{tpu_custom_call.1} parent=11 // pred_fallthru
          _
        // Predicated region
        $region49: #{tpu_custom_call.1} parent=11 // pred_check
          %p500 = pneg %p264
        $region50: #{tpu_custom_call.1} parent=11 // pred_check_branch
          %502 = sbr.rel (%p500) target = $region52
        $region51: #{tpu_custom_call.1} parent=11 // pred_region
          _
        $region52: #{tpu_custom_call.1} parent=11 // pred_fallthru
          _
        // Predicated region
        $region53: #{tpu_custom_call.1} parent=11 // pred_check
          %p503 = pneg %p285
        $region54: #{tpu_custom_call.1} parent=11 // pred_check_branch
          %505 = sbr.rel (%p503) target = $region56
        $region55: #{tpu_custom_call.1} parent=11 // pred_region
          _
        $region56: #{tpu_custom_call.1} parent=11 // pred_fallthru
          _
        // Predicated region
        $region57: #{tpu_custom_call.1} parent=11 // pred_check
          %p506 = pneg %p306
        $region58: #{tpu_custom_call.1} parent=11 // pred_check_branch
          %508 = sbr.rel (%p506) target = $region60
        $region59: #{tpu_custom_call.1} parent=11 // pred_region
          _
        $region60: #{tpu_custom_call.1} parent=11 // pred_fallthru
          _
        // Predicated region
        $region61: #{tpu_custom_call.1} parent=11 // pred_check
          %p509 = pneg %p327
        $region62: #{tpu_custom_call.1} parent=11 // pred_check_branch
          %511 = sbr.rel (%p509) target = $region64
        $region63: #{tpu_custom_call.1} parent=11 // pred_region
          _
        $region64: #{tpu_custom_call.1} parent=11 // pred_fallthru
          _
        // Predicated region
        $region65: #{tpu_custom_call.1} parent=11 // pred_check
          %p512 = pneg %p348
        $region66: #{tpu_custom_call.1} parent=11 // pred_check_branch
          %514 = sbr.rel (%p512) target = $region68
        $region67: #{tpu_custom_call.1} parent=11 // pred_region
          _
        $region68: #{tpu_custom_call.1} parent=11 // pred_fallthru
          _
        // Predicated region
        $region69: #{tpu_custom_call.1} parent=11 // pred_check
          %p515 = pneg %p369
        $region70: #{tpu_custom_call.1} parent=11 // pred_check_branch
          %517 = sbr.rel (%p515) target = $region72
        $region71: #{tpu_custom_call.1} parent=11 // pred_region
          _
        $region72: #{tpu_custom_call.1} parent=11 // pred_fallthru
          _
        // Predicated region
        $region73: #{tpu_custom_call.1} parent=11 // pred_check
          %p518 = pneg %p390
        $region74: #{tpu_custom_call.1} parent=11 // pred_check_branch
          %520 = sbr.rel (%p518) target = $region76
        $region75: #{tpu_custom_call.1} parent=11 // pred_region
          _
        $region76: #{tpu_custom_call.1} parent=11 // pred_fallthru
          _
        // Predicated region
        $region77: #{tpu_custom_call.1} parent=11 // pred_check
          %p521 = pneg %p411
        $region78: #{tpu_custom_call.1} parent=11 // pred_check_branch
          %523 = sbr.rel (%p521) target = $region80
        $region79: #{tpu_custom_call.1} parent=11 // pred_region
          _
        $region80: #{tpu_custom_call.1} parent=11 // pred_fallthru
          _
        // Predicated region
        $region81: #{tpu_custom_call.1} parent=11 // pred_check
          %p524 = pneg %p432
        $region82: #{tpu_custom_call.1} parent=11 // pred_check_branch
          %526 = sbr.rel (%p524) target = $region84
        $region83: #{tpu_custom_call.1} parent=11 // pred_region
          _
        $region84: #{tpu_custom_call.1} parent=11 // pred_fallthru
          _
      $region12: #{tpu_custom_call.1} parent=5 // pred_fallthru
        _
      %p527 = scmp.lt.s32.totalorder %s28, 2
      // Predicated region
      $region85: #{tpu_custom_call.1} parent=5 // pred_check
        %p528 = pneg %p527
      $region86: #{tpu_custom_call.1} parent=5 // pred_check_branch
        %530 = sbr.rel (%p528) target = $region88
      $region87: #{tpu_custom_call.1} parent=5 // pred_region
        // Predicated region
        $region89: #{tpu_custom_call.1} parent=87 // pred_check
          %p531 = pneg %p48
        $region90: #{tpu_custom_call.1} parent=87 // pred_check_branch
          %533 = sbr.rel (%p531) target = $region92
        $region91: #{tpu_custom_call.1} parent=87 // pred_region
          %p534 = scmp.lt.s32.totalorder %s28, 1
          %s535 = scalar_select %p534, %s28, 1
          %s536 = smul.addr %s535, 2
          %s537 = smul.addr %s536, 4
          %s538 = scalar_lea.vmem %s0, %s537
        $region92: #{tpu_custom_call.1} parent=87 // pred_fallthru
          _
      $region88: #{tpu_custom_call.1} parent=5 // pred_fallthru
        _
      %p539 = scmp.le.s32.totalorder 1, %s28
      %p540 = scmp.lt.s32.totalorder %s28, 3
      %p541 = pnand %p539, %p540
      %p542 = pneg %p541
      // Predicated region
      $region93: #{tpu_custom_call.1} parent=5 // pred_check
        _
      $region94: #{tpu_custom_call.1} parent=5 // pred_check_branch
        %544 = sbr.rel (%p541) target = $region96
      $region95: #{tpu_custom_call.1} parent=5 // pred_region
        %s545 = ssub.s32 %s28, 1
        %p546 = scmp.lt.s32.totalorder %s33, 1
        %s547 = scalar_select %p546, %s33, 1
        %s548 = smul.addr %s547, 2
        %s549 = smul.addr %s548, 4
        %s550 = scalar_lea.vmem %s0, %s549
        %p551 = pneg %p54
        %p552 = pneg %p51
        %p553 = pneg %p75
        %p554 = pneg %p72
        %p555 = pneg %p96
        %p556 = pneg %p93
        %p557 = pneg %p117
        %p558 = pneg %p114
        %p559 = pneg %p138
        %p560 = pneg %p135
        %p561 = pneg %p159
        %p562 = pneg %p156
        %p563 = pneg %p180
        %p564 = pneg %p177
        %p565 = pneg %p201
        %p566 = pneg %p198
        %p567 = pneg %p222
        %p568 = pneg %p219
        %p569 = pneg %p243
        %p570 = pneg %p240
        %p571 = pneg %p264
        %p572 = pneg %p261
        %p573 = pneg %p285
        %p574 = pneg %p282
        %p575 = pneg %p306
        %p576 = pneg %p303
        %p577 = pneg %p327
        %p578 = pneg %p324
        %p579 = pneg %p348
        %p580 = pneg %p345
        %p581 = pneg %p369
        %p582 = pneg %p366
        %p583 = pneg %p390
        %p584 = pneg %p387
        %p585 = pneg %p411
        %p586 = pneg %p408
        %p587 = pneg %p432
        %p588 = pneg %p429
        %p589 = pneg %p458
        %p590 = pneg %p455
        %s591 = sand.u32 %s445, 1
        %s592 = scalar_lea.sflag [#allocation4], %s591
        %s593 = sand.u32 %s445, 1
        %s594 = smul.addr %s593, 16
        %s595 = scalar_lea.vmem [#allocation3], %s594
        %p596 = scmp.lt.s32.totalorder %s33, 1
        %s597 = scalar_select %p596, %s33, 1
        %s598 = smul.addr %s597, 2
        %s599 = smul.addr %s598, 4
        %s600 = scalar_lea.vmem %s0, %s599
        %v601 = vld [vmem:[%s600] sm:$0xff]
        %v602 = vlaneseq
        %v603 = vand.u32 %v602, 127
        %v604 = vadd.s32 %v603, 128
        %vm605 = vcmp.lt.s32.totalorder %v603, 0
        %v606 = vsub.s32 0, %v603
        %v607 = vsel %vm605, %v606, %v603
        %v608 = vshrl.u32 %v607, 4
        %v609 = vand.u32 %v607, 15
        %v610 = vsub.s32 0, %v609
        %v611 = vsel %vm605, %v610, %v609
        %vm612 = vcmp.lt.s32.totalorder %v604, 0
        %v613 = vsub.s32 0, %v604
        %v614 = vsel %vm612, %v613, %v604
        %v615 = vshrl.u32 %v614, 4
        %v616 = vand.u32 %v614, 15
        %v617 = vsub.s32 0, %v616
        %v618 = vsel %vm612, %v617, %v616
        %vm619 = vcmp.ne.s32.totalorder %v611, 0
        %vm620 = vcmp.ne.s32.totalorder %v618, 0
        %vm621 = vcmp.lt.s32.totalorder %v611, 0
        %vm622 = vcmp.lt.s32.totalorder %v618, 0
        %vm623 = vmand %vm621, %vm619
        %vm624 = vmand %vm622, %vm620
        %v625 = vadd.s32 %v611, 16
        %v626 = vadd.s32 %v618, 16
        %v627 = vsel %vm623, %v625, %v611
        %v628 = vsel %vm624, %v626, %v618
        %vm629 = vcmp.ge.s32.totalorder %v603, 16
        %vm630 = vcmp.ge.s32.totalorder %v604, 16
        %vm631 = vcmp.ge.s32.totalorder %v627, 1
        %vm632 = vcmp.ge.s32.totalorder %v628, 1
        %vm633 = vmand %vm629, %vm631
        %vm634 = vmand %vm630, %vm632
        %v635 = vsel %vm633, 1, 0
        %v636 = vsel %vm634, 1, 0
        %v637 = vcvt.s32.f32 %v635
        %v638 = vcvt.s32.f32 %v636
        %v639 = vsel %vm629, 1, 0
        %v640 = vsel %vm630, 1, 0
        %v641 = vcvt.s32.f32 %v639
        %v642 = vcvt.s32.f32 %v640
        %vm643 = vcmp.le.s32.totalorder %v627, 14
        %vm644 = vcmp.le.s32.totalorder %v628, 14
        %vm645 = vmand %vm629, %vm643
        %vm646 = vmand %vm630, %vm644
        %v647 = vsel %vm645, 1, 0
        %v648 = vsel %vm646, 1, 0
        %v649 = vcvt.s32.f32 %v647
        %v650 = vcvt.s32.f32 %v648
        %v651 = vsel %vm631, 1, 0
        %v652 = vsel %vm632, 1, 0
        %v653 = vcvt.s32.f32 %v651
        %v654 = vcvt.s32.f32 %v652
        %v655 = vsel %vm643, 1, 0
        %v656 = vsel %vm644, 1, 0
        %v657 = vcvt.s32.f32 %v655
        %v658 = vcvt.s32.f32 %v656
        %vm659 = vcmp.lt.s32.totalorder %v603, 240
        %vm660 = vcmp.lt.s32.totalorder %v604, 240
        %vm661 = vmand %vm659, %vm631
        %vm662 = vmand %vm660, %vm632
        %v663 = vsel %vm661, 1, 0
        %v664 = vsel %vm662, 1, 0
        %v665 = vcvt.s32.f32 %v663
        %v666 = vcvt.s32.f32 %v664
        %v667 = vsel %vm659, 1, 0
        %v668 = vsel %vm660, 1, 0
        %v669 = vcvt.s32.f32 %v667
        %v670 = vcvt.s32.f32 %v668
        %vm671 = vmand %vm659, %vm643
        %vm672 = vmand %vm660, %vm644
        %v673 = vsel %vm671, 1, 0
        %v674 = vsel %vm672, 1, 0
        %v675 = vcvt.s32.f32 %v673
        %v676 = vcvt.s32.f32 %v674
        %v677 = vld [vmem:[%s1] sm:$0xff]
        %679 = vst [vmem:[#allocation1] ss:$2 sm:$0xff] %v601
        %v680 = vld.sshfl [vmem:[#allocation1] sm:$0xff pattern:$0x75316420]
        %v681 = vld.sshfl [vmem:[#allocation1 + $0x8] sm:$0xff pattern:$0x75316420]
        %vm682 = vcmask 31744
        %v684 = vsel %vm682, %v677, 0
        %vm686 = vcmask 1043456
        %v687 = vsel %vm686, %v680, 0
        %v689 = vsel %vm686, %v681, 0
        %691 = vmatpush.msra.mxu0 0.0
        %692 = vmatpush.msra.mxu0 0.0
        %693 = vmatpush.msra.mxu0 0.0
        %694 = vmatpush.msra.mxu0 0.0
        %695 = vmatpush.msra.mxu0 0.0
        %696 = vmatpush.msra.mxu0 0.0
        %697 = vmatpush.msra.mxu0 0.0
        %698 = vmatpush.msra.mxu0 0.0
        %699 = vmatpush.msra.mxu0 0.0
        %700 = vmatpush.msra.mxu0 0.0
        %701 = vmatpush.msra.mxu0 0.0
        %702 = vmatpush.msra.mxu0 0.0
        %703 = vmatpush.msra.mxu0 0.0
        %704 = vmatpush.msra.mxu0 0.0
        %705 = vmatpush.msra.mxu0 0.0
        %706 = vmatpush.msra.mxu0 %v687
        %707 = vmatmul.f32.gmra.mxu0 %v684
        %v708 = vpop.f32.mrf.mxu0
        %v709 = vadd.f32 0.0, %v708
        %710 = vdwg.mxu0
        %711 = vmatpush.msra.mxu0 0.0
        %712 = vmatpush.msra.mxu0 0.0
        %713 = vmatpush.msra.mxu0 0.0
        %714 = vmatpush.msra.mxu0 0.0
        %715 = vmatpush.msra.mxu0 0.0
        %716 = vmatpush.msra.mxu0 0.0
        %717 = vmatpush.msra.mxu0 0.0
        %718 = vmatpush.msra.mxu0 0.0
        %719 = vmatpush.msra.mxu0 0.0
        %720 = vmatpush.msra.mxu0 0.0
        %721 = vmatpush.msra.mxu0 0.0
        %722 = vmatpush.msra.mxu0 0.0
        %723 = vmatpush.msra.mxu0 0.0
        %724 = vmatpush.msra.mxu0 0.0
        %725 = vmatpush.msra.mxu0 0.0
        %726 = vmatpush.msra.mxu0 %v689
        %727 = vmatmul.f32.gmra.mxu0 %v684
        %v728 = vpop.f32.mrf.mxu0
        %v729 = vadd.f32 0.0, %v728
        %730 = vdwg.mxu0
        %v731 = vld [vmem:[%s2] sm:$0xff]
        %733 = vset.pattern.permute.xlu0 0
        %734 = vperm.xlu0 %733, %v731
        %v735 = vpop.permute.xlu0 %734
        %v737 = vmul.f32 %v709, %v735
        %v738 = vmul.f32 %v729, %v735
        %v739 = vld [vmem:[%s3] sm:$0xff]
        %741 = vset.pattern.permute.xlu0 0
        %742 = vperm.xlu0 %741, %v739
        %v743 = vpop.permute.xlu0 %742
        %v745 = vadd.f32 %v737, %v743
        %v746 = vadd.f32 %v738, %v743
        %v747 = vsub.f32 0.0, %v745
        %v748 = vsub.f32 0.0, %v746
        %v749 = vmul.f32 %v747, 1.442695
        %v750 = vpow.pop %v749
        %v751 = vmul.f32 %v748, 1.442695
        %v752 = vpow.pop %v751
        %v753 = vadd.f32 %v750, 1.0
        %v754 = vadd.f32 %v752, 1.0
        %v755 = vrcp.pop %v753
        %v756 = vmul.f32 %v753, %v755
        %v757 = vsub.f32 1.0, %v756
        %v758 = vmul.f32 %v755, %v757
        %v759 = vadd.f32 %v755, %v758
        %vm760 = vweird.f32 %v753
        %vm761 = vweird.f32 %v755
        %vm762 = vmor %vm760, %vm761
        %v763 = vsel %vm762, %v755, %v759
        %v764 = vand.u32 2147483647, %v753
        %vm765 = vcmp.eq.f32.partialorder %v764, 8.507059e+37
        %v766 = vand.u32 %v753, 2147483648
        %v767 = vor.u32 1.1754944e-38, %v766
        %v768 = vsel %vm765, %v767, %v763
        %v769 = vmul.f32 1.0, %v768
        %v770 = vrcp.pop %v754
        %v771 = vmul.f32 %v754, %v770
        %v772 = vsub.f32 1.0, %v771
        %v773 = vmul.f32 %v770, %v772
        %v774 = vadd.f32 %v770, %v773
        %vm775 = vweird.f32 %v754
        %vm776 = vweird.f32 %v770
        %vm777 = vmor %vm775, %vm776
        %v778 = vsel %vm777, %v770, %v774
        %v779 = vand.u32 2147483647, %v754
        %vm780 = vcmp.eq.f32.partialorder %v779, 8.507059e+37
        %v781 = vand.u32 %v754, 2147483648
        %v782 = vor.u32 1.1754944e-38, %v781
        %v783 = vsel %vm780, %v782, %v778
        %v784 = vmul.f32 1.0, %v783
        %v785 = vmul.f32 %v745, %v769
        %v786 = vmul.f32 %v746, %v784
        %v787 = vld [vmem:[%s4] sm:$0xff]
        %vm788 = vcmask 64512
        %v790 = vsel %vm788, %v787, 0
        %792 = vmatpush.msra.mxu0 0.0
        %793 = vmatpush.msra.mxu0 0.0
        %794 = vmatpush.msra.mxu0 0.0
        %795 = vmatpush.msra.mxu0 0.0
        %796 = vmatpush.msra.mxu0 0.0
        %797 = vmatpush.msra.mxu0 0.0
        %798 = vmatpush.msra.mxu0 0.0
        %799 = vmatpush.msra.mxu0 0.0
        %800 = vmatpush.msra.mxu0 0.0
        %801 = vmatpush.msra.mxu0 0.0
        %802 = vmatpush.msra.mxu0 0.0
        %803 = vmatpush.msra.mxu0 0.0
        %804 = vmatpush.msra.mxu0 0.0
        %805 = vmatpush.msra.mxu0 0.0
        %806 = vmatpush.msra.mxu0 0.0
        %807 = vmatpush.msra.mxu0 %v785
        %808 = vmatmul.f32.gmra.mxu0 %v790
        %v809 = vpop.f32.mrf.mxu0
        %v810 = vadd.f32 0.0, %v809
        %811 = vdwg.mxu0
        %812 = vmatpush.msra.mxu0 0.0
        %813 = vmatpush.msra.mxu0 0.0
        %814 = vmatpush.msra.mxu0 0.0
        %815 = vmatpush.msra.mxu0 0.0
        %816 = vmatpush.msra.mxu0 0.0
        %817 = vmatpush.msra.mxu0 0.0
        %818 = vmatpush.msra.mxu0 0.0
        %819 = vmatpush.msra.mxu0 0.0
        %820 = vmatpush.msra.mxu0 0.0
        %821 = vmatpush.msra.mxu0 0.0
        %822 = vmatpush.msra.mxu0 0.0
        %823 = vmatpush.msra.mxu0 0.0
        %824 = vmatpush.msra.mxu0 0.0
        %825 = vmatpush.msra.mxu0 0.0
        %826 = vmatpush.msra.mxu0 0.0
        %827 = vmatpush.msra.mxu0 %v786
        %828 = vmatmul.f32.gmra.mxu0 %v790
        %v829 = vpop.f32.mrf.mxu0
        %v830 = vadd.f32 0.0, %v829
        %831 = vdwg.mxu0
        %v832 = vld [vmem:[%s5] sm:$0xff]
        %834 = vset.pattern.permute.xlu0 0
        %835 = vperm.xlu0 %834, %v832
        %v836 = vpop.permute.xlu0 %835
        %v838 = vmul.f32 %v810, %v836
        %v839 = vmul.f32 %v830, %v836
        %v840 = vld [vmem:[%s6] sm:$0xff]
        %842 = vset.pattern.permute.xlu0 0
        %843 = vperm.xlu0 %842, %v840
        %v844 = vpop.permute.xlu0 %843
        %v846 = vadd.f32 %v838, %v844
        %v847 = vadd.f32 %v839, %v844
        %v848 = vsub.f32 0.0, %v846
        %v849 = vsub.f32 0.0, %v847
        %v850 = vmul.f32 %v848, 1.442695
        %v851 = vpow.pop %v850
        %v852 = vmul.f32 %v849, 1.442695
        %v853 = vpow.pop %v852
        %v854 = vadd.f32 %v851, 1.0
        %v855 = vadd.f32 %v853, 1.0
        %v856 = vrcp.pop %v854
        %v857 = vmul.f32 %v854, %v856
        %v858 = vsub.f32 1.0, %v857
        %v859 = vmul.f32 %v856, %v858
        %v860 = vadd.f32 %v856, %v859
        %vm861 = vweird.f32 %v854
        %vm862 = vweird.f32 %v856
        %vm863 = vmor %vm861, %vm862
        %v864 = vsel %vm863, %v856, %v860
        %v865 = vand.u32 2147483647, %v854
        %vm866 = vcmp.eq.f32.partialorder %v865, 8.507059e+37
        %v867 = vand.u32 %v854, 2147483648
        %v868 = vor.u32 1.1754944e-38, %v867
        %v869 = vsel %vm866, %v868, %v864
        %v870 = vmul.f32 1.0, %v869
        %v871 = vrcp.pop %v855
        %v872 = vmul.f32 %v855, %v871
        %v873 = vsub.f32 1.0, %v872
        %v874 = vmul.f32 %v871, %v873
        %v875 = vadd.f32 %v871, %v874
        %vm876 = vweird.f32 %v855
        %vm877 = vweird.f32 %v871
        %vm878 = vmor %vm876, %vm877
        %v879 = vsel %vm878, %v871, %v875
        %v880 = vand.u32 2147483647, %v855
        %vm881 = vcmp.eq.f32.partialorder %v880, 8.507059e+37
        %v882 = vand.u32 %v855, 2147483648
        %v883 = vor.u32 1.1754944e-38, %v882
        %v884 = vsel %vm881, %v883, %v879
        %v885 = vmul.f32 1.0, %v884
        %v886 = vmul.f32 %v846, %v870
        %v887 = vmul.f32 %v847, %v885
        %888 = vrot.lane.b32.xlu0 %v886, 17
        %v889 = vpop.permute.xlu0 %888
        %890 = vrot.lane.b32.xlu0 %v887, 17
        %v891 = vpop.permute.xlu0 %890
        %vm892 = vcmp.lt.s32.totalorder %v603, 17
        %v893 = vsel %vm892, %v889, %v891
        %v894 = vsel %vm892, %v891, %v889
        %v895 = vmul.f32 %v894, %v637
        %v896 = vmul.f32 %v893, %v638
        %897 = vst [vmem:[#allocation2] sm:$0xff] %v895
        %898 = vst [vmem:[#allocation2 + $0x8] sm:$0xff] %v896
        %899 = vrot.lane.b32.xlu0 %v886, 16
        %v900 = vpop.permute.xlu0 %899
        %901 = vrot.lane.b32.xlu0 %v887, 16
        %v902 = vpop.permute.xlu0 %901
        %vm903 = vcmp.lt.s32.totalorder %v603, 16
        %v904 = vsel %vm903, %v900, %v902
        %v905 = vsel %vm903, %v902, %v900
        %v906 = vmul.f32 %v905, %v641
        %v907 = vmul.f32 %v904, %v642
        %908 = vst [vmem:[#allocation2 + $0x10] sm:$0xff] %v906
        %909 = vst [vmem:[#allocation2 + $0x18] sm:$0xff] %v907
        %910 = vrot.lane.b32.xlu0 %v886, 15
        %v911 = vpop.permute.xlu0 %910
        %912 = vrot.lane.b32.xlu0 %v887, 15
        %v913 = vpop.permute.xlu0 %912
        %vm914 = vcmp.lt.s32.totalorder %v603, 15
        %v915 = vsel %vm914, %v911, %v913
        %v916 = vsel %vm914, %v913, %v911
        %v917 = vmul.f32 %v916, %v649
        %v918 = vmul.f32 %v915, %v650
        %919 = vst [vmem:[#allocation2 + $0x20] sm:$0xff] %v917
        %920 = vst [vmem:[#allocation2 + $0x28] sm:$0xff] %v918
        %921 = vrot.lane.b32.xlu0 %v886, 1
        %v922 = vpop.permute.xlu0 %921
        %923 = vrot.lane.b32.xlu0 %v887, 1
        %v924 = vpop.permute.xlu0 %923
        %vm925 = vcmp.lt.s32.totalorder %v603, 1
        %v926 = vsel %vm925, %v922, %v924
        %v927 = vsel %vm925, %v924, %v922
        %v928 = vmul.f32 %v927, %v653
        %v929 = vmul.f32 %v926, %v654
        %930 = vst [vmem:[#allocation2 + $0x30] sm:$0xff] %v928
        %931 = vst [vmem:[#allocation2 + $0x38] sm:$0xff] %v929
        %932 = vst [vmem:[#allocation2 + $0x40] sm:$0xff] %v886
        %933 = vst [vmem:[#allocation2 + $0x48] sm:$0xff] %v887
        %934 = vrot.lane.b32.xlu0 %v886, 127
        %v935 = vpop.permute.xlu0 %934
        %936 = vrot.lane.b32.xlu0 %v887, 127
        %v937 = vpop.permute.xlu0 %936
        %vm938 = vcmp.lt.s32.totalorder %v603, 127
        %v939 = vsel %vm938, %v935, %v937
        %v940 = vsel %vm938, %v937, %v935
        %v941 = vmul.f32 %v939, %v657
        %v942 = vmul.f32 %v940, %v658
        %943 = vst [vmem:[#allocation2 + $0x50] sm:$0xff] %v941
        %944 = vst [vmem:[#allocation2 + $0x58] sm:$0xff] %v942
        %945 = vrot.lane.b32.xlu0 %v886, 113
        %v946 = vpop.permute.xlu0 %945
        %947 = vrot.lane.b32.xlu0 %v887, 113
        %v948 = vpop.permute.xlu0 %947
        %vm949 = vcmp.lt.s32.totalorder %v603, 113
        %v950 = vsel %vm949, %v946, %v948
        %v951 = vsel %vm949, %v948, %v946
        %v952 = vmul.f32 %v950, %v665
        %v953 = vmul.f32 %v951, %v666
        %954 = vst [vmem:[#allocation2 + $0x60] sm:$0xff] %v952
        %955 = vst [vmem:[#allocation2 + $0x68] sm:$0xff] %v953
        %956 = vrot.lane.b32.xlu0 %v886, 112
        %v957 = vpop.permute.xlu0 %956
        %958 = vrot.lane.b32.xlu0 %v887, 112
        %v959 = vpop.permute.xlu0 %958
        %vm960 = vcmp.lt.s32.totalorder %v603, 112
        %v961 = vsel %vm960, %v957, %v959
        %v962 = vsel %vm960, %v959, %v957
        %v963 = vmul.f32 %v961, %v669
        %v964 = vmul.f32 %v962, %v670
        %965 = vst [vmem:[#allocation2 + $0x70] sm:$0xff] %v963
        %966 = vst [vmem:[#allocation2 + $0x78] sm:$0xff] %v964
        %967 = vrot.lane.b32.xlu0 %v886, 111
        %v968 = vpop.permute.xlu0 %967
        %969 = vrot.lane.b32.xlu0 %v887, 111
        %v970 = vpop.permute.xlu0 %969
        %vm971 = vcmp.lt.s32.totalorder %v603, 111
        %v972 = vsel %vm971, %v968, %v970
        %v973 = vsel %vm971, %v970, %v968
        %v974 = vmul.f32 %v972, %v675
        %v975 = vmul.f32 %v973, %v676
        %976 = vst [vmem:[#allocation2 + $0x80] sm:$0xff] %v974
        %977 = vst [vmem:[#allocation2 + $0x88] sm:$0xff] %v975
        %v978 = vld [vmem:[%s7] sm:$0xff]
        %v979 = vld [vmem:[#allocation2] sm:$0xff]
        %v980 = vld [vmem:[#allocation2 + $0x8] sm:$0xff]
        %v981 = vld [vmem:[#allocation2 + $0x10] sm:$0xff]
        %v982 = vld [vmem:[#allocation2 + $0x18] sm:$0xff]
        %v983 = vld [vmem:[#allocation2 + $0x20] sm:$0xff]
        %v984 = vld [vmem:[#allocation2 + $0x28] sm:$0xff]
        %v985 = vld [vmem:[#allocation2 + $0x30] sm:$0xff]
        %v986 = vld [vmem:[#allocation2 + $0x38] sm:$0xff]
        %v987 = vld [vmem:[#allocation2 + $0x40] sm:$0xff]
        %v988 = vld [vmem:[#allocation2 + $0x48] sm:$0xff]
        %v989 = vld [vmem:[#allocation2 + $0x50] sm:$0xff]
        %v990 = vld [vmem:[#allocation2 + $0x58] sm:$0xff]
        %v991 = vld [vmem:[#allocation2 + $0x60] sm:$0xff]
        %v992 = vld [vmem:[#allocation2 + $0x68] sm:$0xff]
        %v993 = vld [vmem:[#allocation2 + $0x70] sm:$0xff]
        %v994 = vld [vmem:[#allocation2 + $0x78] sm:$0xff]
        %v995 = vld [vmem:[#allocation2 + $0x80] sm:$0xff]
        %v996 = vld [vmem:[#allocation2 + $0x88] sm:$0xff]
        %vm997 = vcmask 588800
        %v999 = vsel %vm997, %v978, 0
        %1001 = vmatpush.msra.mxu0 0.0
        %1002 = vmatpush.msra.mxu0 0.0
        %1003 = vmatpush.msra.mxu0 0.0
        %1004 = vmatpush.msra.mxu0 0.0
        %1005 = vmatpush.msra.mxu0 0.0
        %1006 = vmatpush.msra.mxu0 0.0
        %1007 = vmatpush.msra.mxu0 0.0
        %1008 = vmatpush.msra.mxu0 %v995
        %1009 = vmatpush.msra.mxu0 %v993
        %1010 = vmatpush.msra.mxu0 %v991
        %1011 = vmatpush.msra.mxu0 %v989
        %1012 = vmatpush.msra.mxu0 %v987
        %1013 = vmatpush.msra.mxu0 %v985
        %1014 = vmatpush.msra.mxu0 %v983
        %1015 = vmatpush.msra.mxu0 %v981
        %1016 = vmatpush.msra.mxu0 %v979
        %1017 = vmatmul.f32.gmra.mxu0 %v999
        %v1018 = vpop.f32.mrf.mxu0
        %v1019 = vadd.f32 0.0, %v1018
        %1020 = vdwg.mxu0
        %1021 = vmatpush.msra.mxu0 0.0
        %1022 = vmatpush.msra.mxu0 0.0
        %1023 = vmatpush.msra.mxu0 0.0
        %1024 = vmatpush.msra.mxu0 0.0
        %1025 = vmatpush.msra.mxu0 0.0
        %1026 = vmatpush.msra.mxu0 0.0
        %1027 = vmatpush.msra.mxu0 0.0
        %1028 = vmatpush.msra.mxu0 %v996
        %1029 = vmatpush.msra.mxu0 %v994
        %1030 = vmatpush.msra.mxu0 %v992
        %1031 = vmatpush.msra.mxu0 %v990
        %1032 = vmatpush.msra.mxu0 %v988
        %1033 = vmatpush.msra.mxu0 %v986
        %1034 = vmatpush.msra.mxu0 %v984
        %1035 = vmatpush.msra.mxu0 %v982
        %1036 = vmatpush.msra.mxu0 %v980
        %1037 = vmatmul.f32.gmra.mxu0 %v999
        %v1038 = vpop.f32.mrf.mxu0
        %v1039 = vadd.f32 0.0, %v1038
        %1040 = vdwg.mxu0
        %v1041 = vld [vmem:[%s8] sm:$0xff]
        %1043 = vset.pattern.permute.xlu0 0
        %1044 = vperm.xlu0 %1043, %v1041
        %v1045 = vpop.permute.xlu0 %1044
        %v1047 = vmul.f32 %v1019, %v1045
        %v1048 = vmul.f32 %v1039, %v1045
        %v1049 = vld [vmem:[%s9] sm:$0xff]
        %1051 = vset.pattern.permute.xlu0 0
        %1052 = vperm.xlu0 %1051, %v1049
        %v1053 = vpop.permute.xlu0 %1052
        %v1055 = vadd.f32 %v1047, %v1053
        %v1056 = vadd.f32 %v1048, %v1053
        %v1057 = vsub.f32 0.0, %v1055
        %v1058 = vsub.f32 0.0, %v1056
        %v1059 = vmul.f32 %v1057, 1.442695
        %v1060 = vpow.pop %v1059
        %v1061 = vmul.f32 %v1058, 1.442695
        %v1062 = vpow.pop %v1061
        %v1063 = vadd.f32 %v1060, 1.0
        %v1064 = vadd.f32 %v1062, 1.0
        %v1065 = vrcp.pop %v1063
        %v1066 = vmul.f32 %v1063, %v1065
        %v1067 = vsub.f32 1.0, %v1066
        %v1068 = vmul.f32 %v1065, %v1067
        %v1069 = vadd.f32 %v1065, %v1068
        %vm1070 = vweird.f32 %v1063
        %vm1071 = vweird.f32 %v1065
        %vm1072 = vmor %vm1070, %vm1071
        %v1073 = vsel %vm1072, %v1065, %v1069
        %v1074 = vand.u32 2147483647, %v1063
        %vm1075 = vcmp.eq.f32.partialorder %v1074, 8.507059e+37
        %v1076 = vand.u32 %v1063, 2147483648
        %v1077 = vor.u32 1.1754944e-38, %v1076
        %v1078 = vsel %vm1075, %v1077, %v1073
        %v1079 = vmul.f32 1.0, %v1078
        %v1080 = vrcp.pop %v1064
        %v1081 = vmul.f32 %v1064, %v1080
        %v1082 = vsub.f32 1.0, %v1081
        %v1083 = vmul.f32 %v1080, %v1082
        %v1084 = vadd.f32 %v1080, %v1083
        %vm1085 = vweird.f32 %v1064
        %vm1086 = vweird.f32 %v1080
        %vm1087 = vmor %vm1085, %vm1086
        %v1088 = vsel %vm1087, %v1080, %v1084
        %v1089 = vand.u32 2147483647, %v1064
        %vm1090 = vcmp.eq.f32.partialorder %v1089, 8.507059e+37
        %v1091 = vand.u32 %v1064, 2147483648
        %v1092 = vor.u32 1.1754944e-38, %v1091
        %v1093 = vsel %vm1090, %v1092, %v1088
        %v1094 = vmul.f32 1.0, %v1093
        %v1095 = vmul.f32 %v1055, %v1079
        %v1096 = vmul.f32 %v1056, %v1094
        %v1097 = vadd.f32 %v785, %v1095
        %v1098 = vadd.f32 %v786, %v1096
        %s1099 = scalar_lea.vmem %s4, 8
        %v1100 = vld [vmem:[%s1099] sm:$0xff]
        %v1102 = vsel %vm788, %v1100, 0
        %1104 = vmatpush.msra.mxu0 0.0
        %1105 = vmatpush.msra.mxu0 0.0
        %1106 = vmatpush.msra.mxu0 0.0
        %1107 = vmatpush.msra.mxu0 0.0
        %1108 = vmatpush.msra.mxu0 0.0
        %1109 = vmatpush.msra.mxu0 0.0
        %1110 = vmatpush.msra.mxu0 0.0
        %1111 = vmatpush.msra.mxu0 0.0
        %1112 = vmatpush.msra.mxu0 0.0
        %1113 = vmatpush.msra.mxu0 0.0
        %1114 = vmatpush.msra.mxu0 0.0
        %1115 = vmatpush.msra.mxu0 0.0
        %1116 = vmatpush.msra.mxu0 0.0
        %1117 = vmatpush.msra.mxu0 0.0
        %1118 = vmatpush.msra.mxu0 0.0
        %1119 = vmatpush.msra.mxu0 %v1097
        %1120 = vmatmul.f32.gmra.mxu0 %v1102
        %v1121 = vpop.f32.mrf.mxu0
        %v1122 = vadd.f32 0.0, %v1121
        %1123 = vdwg.mxu0
        %1124 = vmatpush.msra.mxu0 0.0
        %1125 = vmatpush.msra.mxu0 0.0
        %1126 = vmatpush.msra.mxu0 0.0
        %1127 = vmatpush.msra.mxu0 0.0
        %1128 = vmatpush.msra.mxu0 0.0
        %1129 = vmatpush.msra.mxu0 0.0
        %1130 = vmatpush.msra.mxu0 0.0
        %1131 = vmatpush.msra.mxu0 0.0
        %1132 = vmatpush.msra.mxu0 0.0
        %1133 = vmatpush.msra.mxu0 0.0
        %1134 = vmatpush.msra.mxu0 0.0
        %1135 = vmatpush.msra.mxu0 0.0
        %1136 = vmatpush.msra.mxu0 0.0
        %1137 = vmatpush.msra.mxu0 0.0
        %1138 = vmatpush.msra.mxu0 0.0
        %1139 = vmatpush.msra.mxu0 %v1098
        %1140 = vmatmul.f32.gmra.mxu0 %v1102
        %v1141 = vpop.f32.mrf.mxu0
        %v1142 = vadd.f32 0.0, %v1141
        %1143 = vdwg.mxu0
        %s1144 = scalar_lea.vmem %s5, 8
        %v1145 = vld [vmem:[%s1144] sm:$0xff]
        %1147 = vset.pattern.permute.xlu0 0
        %1148 = vperm.xlu0 %1147, %v1145
        %v1149 = vpop.permute.xlu0 %1148
        %v1151 = vmul.f32 %v1122, %v1149
        %v1152 = vmul.f32 %v1142, %v1149
        %s1153 = scalar_lea.vmem %s6, 8
        %v1154 = vld [vmem:[%s1153] sm:$0xff]
        %1156 = vset.pattern.permute.xlu0 0
        %1157 = vperm.xlu0 %1156, %v1154
        %v1158 = vpop.permute.xlu0 %1157
        %v1160 = vadd.f32 %v1151, %v1158
        %v1161 = vadd.f32 %v1152, %v1158
        %v1162 = vsub.f32 0.0, %v1160
        %v1163 = vsub.f32 0.0, %v1161
        %v1164 = vmul.f32 %v1162, 1.442695
        %v1165 = vpow.pop %v1164
        %v1166 = vmul.f32 %v1163, 1.442695
        %v1167 = vpow.pop %v1166
        %v1168 = vadd.f32 %v1165, 1.0
        %v1169 = vadd.f32 %v1167, 1.0
        %v1170 = vrcp.pop %v1168
        %v1171 = vmul.f32 %v1168, %v1170
        %v1172 = vsub.f32 1.0, %v1171
        %v1173 = vmul.f32 %v1170, %v1172
        %v1174 = vadd.f32 %v1170, %v1173
        %vm1175 = vweird.f32 %v1168
        %vm1176 = vweird.f32 %v1170
        %vm1177 = vmor %vm1175, %vm1176
        %v1178 = vsel %vm1177, %v1170, %v1174
        %v1179 = vand.u32 2147483647, %v1168
        %vm1180 = vcmp.eq.f32.partialorder %v1179, 8.507059e+37
        %v1181 = vand.u32 %v1168, 2147483648
        %v1182 = vor.u32 1.1754944e-38, %v1181
        %v1183 = vsel %vm1180, %v1182, %v1178
        %v1184 = vmul.f32 1.0, %v1183
        %v1185 = vrcp.pop %v1169
        %v1186 = vmul.f32 %v1169, %v1185
        %v1187 = vsub.f32 1.0, %v1186
        %v1188 = vmul.f32 %v1185, %v1187
        %v1189 = vadd.f32 %v1185, %v1188
        %vm1190 = vweird.f32 %v1169
        %vm1191 = vweird.f32 %v1185
        %vm1192 = vmor %vm1190, %vm1191
        %v1193 = vsel %vm1192, %v1185, %v1189
        %v1194 = vand.u32 2147483647, %v1169
        %vm1195 = vcmp.eq.f32.partialorder %v1194, 8.507059e+37
        %v1196 = vand.u32 %v1169, 2147483648
        %v1197 = vor.u32 1.1754944e-38, %v1196
        %v1198 = vsel %vm1195, %v1197, %v1193
        %v1199 = vmul.f32 1.0, %v1198
        %v1200 = vmul.f32 %v1160, %v1184
        %v1201 = vmul.f32 %v1161, %v1199
        %1202 = vrot.lane.b32.xlu0 %v1200, 17
        %v1203 = vpop.permute.xlu0 %1202
        %1204 = vrot.lane.b32.xlu0 %v1201, 17
        %v1205 = vpop.permute.xlu0 %1204
        %v1206 = vsel %vm892, %v1203, %v1205
        %v1207 = vsel %vm892, %v1205, %v1203
        %v1208 = vmul.f32 %v1207, %v637
        %v1209 = vmul.f32 %v1206, %v638
        %1210 = vst [vmem:[#allocation2] sm:$0xff] %v1208
        %1211 = vst [vmem:[#allocation2 + $0x8] sm:$0xff] %v1209
        %1212 = vrot.lane.b32.xlu0 %v1200, 16
        %v1213 = vpop.permute.xlu0 %1212
        %1214 = vrot.lane.b32.xlu0 %v1201, 16
        %v1215 = vpop.permute.xlu0 %1214
        %v1216 = vsel %vm903, %v1213, %v1215
        %v1217 = vsel %vm903, %v1215, %v1213
        %v1218 = vmul.f32 %v1217, %v641
        %v1219 = vmul.f32 %v1216, %v642
        %1220 = vst [vmem:[#allocation2 + $0x10] sm:$0xff] %v1218
        %1221 = vst [vmem:[#allocation2 + $0x18] sm:$0xff] %v1219
        %1222 = vrot.lane.b32.xlu0 %v1200, 15
        %v1223 = vpop.permute.xlu0 %1222
        %1224 = vrot.lane.b32.xlu0 %v1201, 15
        %v1225 = vpop.permute.xlu0 %1224
        %v1226 = vsel %vm914, %v1223, %v1225
        %v1227 = vsel %vm914, %v1225, %v1223
        %v1228 = vmul.f32 %v1227, %v649
        %v1229 = vmul.f32 %v1226, %v650
        %1230 = vst [vmem:[#allocation2 + $0x20] sm:$0xff] %v1228
        %1231 = vst [vmem:[#allocation2 + $0x28] sm:$0xff] %v1229
        %1232 = vrot.lane.b32.xlu0 %v1200, 1
        %v1233 = vpop.permute.xlu0 %1232
        %1234 = vrot.lane.b32.xlu0 %v1201, 1
        %v1235 = vpop.permute.xlu0 %1234
        %v1236 = vsel %vm925, %v1233, %v1235
        %v1237 = vsel %vm925, %v1235, %v1233
        %v1238 = vmul.f32 %v1237, %v653
        %v1239 = vmul.f32 %v1236, %v654
        %1240 = vst [vmem:[#allocation2 + $0x30] sm:$0xff] %v1238
        %1241 = vst [vmem:[#allocation2 + $0x38] sm:$0xff] %v1239
        %1242 = vst [vmem:[#allocation2 + $0x40] sm:$0xff] %v1200
        %1243 = vst [vmem:[#allocation2 + $0x48] sm:$0xff] %v1201
        %1244 = vrot.lane.b32.xlu0 %v1200, 127
        %v1245 = vpop.permute.xlu0 %1244
        %1246 = vrot.lane.b32.xlu0 %v1201, 127
        %v1247 = vpop.permute.xlu0 %1246
        %v1248 = vsel %vm938, %v1245, %v1247
        %v1249 = vsel %vm938, %v1247, %v1245
        %v1250 = vmul.f32 %v1248, %v657
        %v1251 = vmul.f32 %v1249, %v658
        %1252 = vst [vmem:[#allocation2 + $0x50] sm:$0xff] %v1250
        %1253 = vst [vmem:[#allocation2 + $0x58] sm:$0xff] %v1251
        %1254 = vrot.lane.b32.xlu0 %v1200, 113
        %v1255 = vpop.permute.xlu0 %1254
        %1256 = vrot.lane.b32.xlu0 %v1201, 113
        %v1257 = vpop.permute.xlu0 %1256
        %v1258 = vsel %vm949, %v1255, %v1257
        %v1259 = vsel %vm949, %v1257, %v1255
        %v1260 = vmul.f32 %v1258, %v665
        %v1261 = vmul.f32 %v1259, %v666
        %1262 = vst [vmem:[#allocation2 + $0x60] sm:$0xff] %v1260
        %1263 = vst [vmem:[#allocation2 + $0x68] sm:$0xff] %v1261
        %1264 = vrot.lane.b32.xlu0 %v1200, 112
        %v1265 = vpop.permute.xlu0 %1264
        %1266 = vrot.lane.b32.xlu0 %v1201, 112
        %v1267 = vpop.permute.xlu0 %1266
        %v1268 = vsel %vm960, %v1265, %v1267
        %v1269 = vsel %vm960, %v1267, %v1265
        %v1270 = vmul.f32 %v1268, %v669
        %v1271 = vmul.f32 %v1269, %v670
        %1272 = vst [vmem:[#allocation2 + $0x70] sm:$0xff] %v1270
        %1273 = vst [vmem:[#allocation2 + $0x78] sm:$0xff] %v1271
        %1274 = vrot.lane.b32.xlu0 %v1200, 111
        %v1275 = vpop.permute.xlu0 %1274
        %1276 = vrot.lane.b32.xlu0 %v1201, 111
        %v1277 = vpop.permute.xlu0 %1276
        %v1278 = vsel %vm971, %v1275, %v1277
        %v1279 = vsel %vm971, %v1277, %v1275
        %v1280 = vmul.f32 %v1278, %v675
        %v1281 = vmul.f32 %v1279, %v676
        %1282 = vst [vmem:[#allocation2 + $0x80] sm:$0xff] %v1280
        %1283 = vst [vmem:[#allocation2 + $0x88] sm:$0xff] %v1281
        %s1284 = scalar_lea.vmem %s7, 8
        %v1285 = vld [vmem:[%s1284] sm:$0xff]
        %v1286 = vld [vmem:[#allocation2] sm:$0xff]
        %v1287 = vld [vmem:[#allocation2 + $0x8] sm:$0xff]
        %v1288 = vld [vmem:[#allocation2 + $0x10] sm:$0xff]
        %v1289 = vld [vmem:[#allocation2 + $0x18] sm:$0xff]
        %v1290 = vld [vmem:[#allocation2 + $0x20] sm:$0xff]
        %v1291 = vld [vmem:[#allocation2 + $0x28] sm:$0xff]
        %v1292 = vld [vmem:[#allocation2 + $0x30] sm:$0xff]
        %v1293 = vld [vmem:[#allocation2 + $0x38] sm:$0xff]
        %v1294 = vld [vmem:[#allocation2 + $0x40] sm:$0xff]
        %v1295 = vld [vmem:[#allocation2 + $0x48] sm:$0xff]
        %v1296 = vld [vmem:[#allocation2 + $0x50] sm:$0xff]
        %v1297 = vld [vmem:[#allocation2 + $0x58] sm:$0xff]
        %v1298 = vld [vmem:[#allocation2 + $0x60] sm:$0xff]
        %v1299 = vld [vmem:[#allocation2 + $0x68] sm:$0xff]
        %v1300 = vld [vmem:[#allocation2 + $0x70] sm:$0xff]
        %v1301 = vld [vmem:[#allocation2 + $0x78] sm:$0xff]
        %v1302 = vld [vmem:[#allocation2 + $0x80] sm:$0xff]
        %v1303 = vld [vmem:[#allocation2 + $0x88] sm:$0xff]
        %v1305 = vsel %vm997, %v1285, 0
        %1307 = vmatpush.msra.mxu0 0.0
        %1308 = vmatpush.msra.mxu0 0.0
        %1309 = vmatpush.msra.mxu0 0.0
        %1310 = vmatpush.msra.mxu0 0.0
        %1311 = vmatpush.msra.mxu0 0.0
        %1312 = vmatpush.msra.mxu0 0.0
        %1313 = vmatpush.msra.mxu0 0.0
        %1314 = vmatpush.msra.mxu0 %v1302
        %1315 = vmatpush.msra.mxu0 %v1300
        %1316 = vmatpush.msra.mxu0 %v1298
        %1317 = vmatpush.msra.mxu0 %v1296
        %1318 = vmatpush.msra.mxu0 %v1294
        %1319 = vmatpush.msra.mxu0 %v1292
        %1320 = vmatpush.msra.mxu0 %v1290
        %1321 = vmatpush.msra.mxu0 %v1288
        %1322 = vmatpush.msra.mxu0 %v1286
        %1323 = vmatmul.f32.gmra.mxu0 %v1305
        %v1324 = vpop.f32.mrf.mxu0
        %v1325 = vadd.f32 0.0, %v1324
        %1326 = vdwg.mxu0
        %1327 = vmatpush.msra.mxu0 0.0
        %1328 = vmatpush.msra.mxu0 0.0
        %1329 = vmatpush.msra.mxu0 0.0
        %1330 = vmatpush.msra.mxu0 0.0
        %1331 = vmatpush.msra.mxu0 0.0
        %1332 = vmatpush.msra.mxu0 0.0
        %1333 = vmatpush.msra.mxu0 0.0
        %1334 = vmatpush.msra.mxu0 %v1303
        %1335 = vmatpush.msra.mxu0 %v1301
        %1336 = vmatpush.msra.mxu0 %v1299
        %1337 = vmatpush.msra.mxu0 %v1297
        %1338 = vmatpush.msra.mxu0 %v1295
        %1339 = vmatpush.msra.mxu0 %v1293
        %1340 = vmatpush.msra.mxu0 %v1291
        %1341 = vmatpush.msra.mxu0 %v1289
        %1342 = vmatpush.msra.mxu0 %v1287
        %1343 = vmatmul.f32.gmra.mxu0 %v1305
        %v1344 = vpop.f32.mrf.mxu0
        %v1345 = vadd.f32 0.0, %v1344
        %1346 = vdwg.mxu0
        %s1347 = scalar_lea.vmem %s8, 8
        %v1348 = vld [vmem:[%s1347] sm:$0xff]
        %1350 = vset.pattern.permute.xlu0 0
        %1351 = vperm.xlu0 %1350, %v1348
        %v1352 = vpop.permute.xlu0 %1351
        %v1354 = vmul.f32 %v1325, %v1352
        %v1355 = vmul.f32 %v1345, %v1352
        %s1356 = scalar_lea.vmem %s9, 8
        %v1357 = vld [vmem:[%s1356] sm:$0xff]
        %1359 = vset.pattern.permute.xlu0 0
        %1360 = vperm.xlu0 %1359, %v1357
        %v1361 = vpop.permute.xlu0 %1360
        %v1363 = vadd.f32 %v1354, %v1361
        %v1364 = vadd.f32 %v1355, %v1361
        %v1365 = vsub.f32 0.0, %v1363
        %v1366 = vsub.f32 0.0, %v1364
        %v1367 = vmul.f32 %v1365, 1.442695
        %v1368 = vpow.pop %v1367
        %v1369 = vmul.f32 %v1366, 1.442695
        %v1370 = vpow.pop %v1369
        %v1371 = vadd.f32 %v1368, 1.0
        %v1372 = vadd.f32 %v1370, 1.0
        %v1373 = vrcp.pop %v1371
        %v1374 = vmul.f32 %v1371, %v1373
        %v1375 = vsub.f32 1.0, %v1374
        %v1376 = vmul.f32 %v1373, %v1375
        %v1377 = vadd.f32 %v1373, %v1376
        %vm1378 = vweird.f32 %v1371
        %vm1379 = vweird.f32 %v1373
        %vm1380 = vmor %vm1378, %vm1379
        %v1381 = vsel %vm1380, %v1373, %v1377
        %v1382 = vand.u32 2147483647, %v1371
        %vm1383 = vcmp.eq.f32.partialorder %v1382, 8.507059e+37
        %v1384 = vand.u32 %v1371, 2147483648
        %v1385 = vor.u32 1.1754944e-38, %v1384
        %v1386 = vsel %vm1383, %v1385, %v1381
        %v1387 = vmul.f32 1.0, %v1386
        %v1388 = vrcp.pop %v1372
        %v1389 = vmul.f32 %v1372, %v1388
        %v1390 = vsub.f32 1.0, %v1389
        %v1391 = vmul.f32 %v1388, %v1390
        %v1392 = vadd.f32 %v1388, %v1391
        %vm1393 = vweird.f32 %v1372
        %vm1394 = vweird.f32 %v1388
        %vm1395 = vmor %vm1393, %vm1394
        %v1396 = vsel %vm1395, %v1388, %v1392
        %v1397 = vand.u32 2147483647, %v1372
        %vm1398 = vcmp.eq.f32.partialorder %v1397, 8.507059e+37
        %v1399 = vand.u32 %v1372, 2147483648
        %v1400 = vor.u32 1.1754944e-38, %v1399
        %v1401 = vsel %vm1398, %v1400, %v1396
        %v1402 = vmul.f32 1.0, %v1401
        %v1403 = vmul.f32 %v1363, %v1387
        %v1404 = vmul.f32 %v1364, %v1402
        %v1405 = vadd.f32 %v1097, %v1403
        %v1406 = vadd.f32 %v1098, %v1404
        %v1407 = vld [vmem:[%s10] sm:$0xff]
        %v1409 = vsel %vm788, %v1407, 0
        %1411 = vmatpush.msra.mxu0 0.0
        %1412 = vmatpush.msra.mxu0 0.0
        %1413 = vmatpush.msra.mxu0 0.0
        %1414 = vmatpush.msra.mxu0 0.0
        %1415 = vmatpush.msra.mxu0 0.0
        %1416 = vmatpush.msra.mxu0 0.0
        %1417 = vmatpush.msra.mxu0 0.0
        %1418 = vmatpush.msra.mxu0 0.0
        %1419 = vmatpush.msra.mxu0 0.0
        %1420 = vmatpush.msra.mxu0 0.0
        %1421 = vmatpush.msra.mxu0 0.0
        %1422 = vmatpush.msra.mxu0 0.0
        %1423 = vmatpush.msra.mxu0 0.0
        %1424 = vmatpush.msra.mxu0 0.0
        %1425 = vmatpush.msra.mxu0 0.0
        %1426 = vmatpush.msra.mxu0 %v1405
        %1427 = vmatmul.f32.gmra.mxu0 %v1409
        %v1428 = vpop.f32.mrf.mxu0
        %v1429 = vadd.f32 0.0, %v1428
        %1430 = vdwg.mxu0
        %1431 = vmatpush.msra.mxu0 0.0
        %1432 = vmatpush.msra.mxu0 0.0
        %1433 = vmatpush.msra.mxu0 0.0
        %1434 = vmatpush.msra.mxu0 0.0
        %1435 = vmatpush.msra.mxu0 0.0
        %1436 = vmatpush.msra.mxu0 0.0
        %1437 = vmatpush.msra.mxu0 0.0
        %1438 = vmatpush.msra.mxu0 0.0
        %1439 = vmatpush.msra.mxu0 0.0
        %1440 = vmatpush.msra.mxu0 0.0
        %1441 = vmatpush.msra.mxu0 0.0
        %1442 = vmatpush.msra.mxu0 0.0
        %1443 = vmatpush.msra.mxu0 0.0
        %1444 = vmatpush.msra.mxu0 0.0
        %1445 = vmatpush.msra.mxu0 0.0
        %1446 = vmatpush.msra.mxu0 %v1406
        %1447 = vmatmul.f32.gmra.mxu0 %v1409
        %v1448 = vpop.f32.mrf.mxu0
        %v1449 = vadd.f32 0.0, %v1448
        %1450 = vdwg.mxu0
        %v1451 = vld [vmem:[%s12] sm:$0xff]
        %1453 = vset.pattern.permute.xlu0 0
        %1454 = vperm.xlu0 %1453, %v1451
        %v1455 = vpop.permute.xlu0 %1454
        %v1457 = vmul.f32 %v1429, %v1455
        %v1458 = vmul.f32 %v1449, %v1455
        %v1459 = vld [vmem:[%s13] sm:$0xff]
        %1461 = vset.pattern.permute.xlu0 0
        %1462 = vperm.xlu0 %1461, %v1459
        %v1463 = vpop.permute.xlu0 %1462
        %v1465 = vadd.f32 %v1457, %v1463
        %v1466 = vadd.f32 %v1458, %v1463
        %vm1467 = vcmp.ge.f32.partialorder %v1465, 0.0
        %vm1468 = vcmp.ge.f32.partialorder %v1466, 0.0
        %v1469 = vmul.f32 %v1465, 0.1
        %v1470 = vmul.f32 %v1466, 0.1
        %v1471 = vsel %vm1467, %v1465, %v1469
        %v1472 = vsel %vm1468, %v1466, %v1470
        %v1473 = vld [vmem:[%s11] sm:$0xff]
        %1474 = vst [vmem:[#allocation1] ss:$2 sm:$0xff] %v601
        %v1475 = vld.sshfl [vmem:[#allocation1] sm:$0xff pattern:$0x75316420]
        %v1476 = vld.sshfl [vmem:[#allocation1 + $0x8] sm:$0xff pattern:$0x75316420]
        %v1478 = vsel %vm682, %v1473, 0
        %v1480 = vsel %vm686, %v1475, 0
        %v1482 = vsel %vm686, %v1476, 0
        %1484 = vmatpush.msra.mxu0 0.0
        %1485 = vmatpush.msra.mxu0 0.0
        %1486 = vmatpush.msra.mxu0 0.0
        %1487 = vmatpush.msra.mxu0 0.0
        %1488 = vmatpush.msra.mxu0 0.0
        %1489 = vmatpush.msra.mxu0 0.0
        %1490 = vmatpush.msra.mxu0 0.0
        %1491 = vmatpush.msra.mxu0 0.0
        %1492 = vmatpush.msra.mxu0 0.0
        %1493 = vmatpush.msra.mxu0 0.0
        %1494 = vmatpush.msra.mxu0 0.0
        %1495 = vmatpush.msra.mxu0 0.0
        %1496 = vmatpush.msra.mxu0 0.0
        %1497 = vmatpush.msra.mxu0 0.0
        %1498 = vmatpush.msra.mxu0 0.0
        %1499 = vmatpush.msra.mxu0 %v1480
        %1500 = vmatmul.f32.gmra.mxu0 %v1478
        %v1501 = vpop.f32.mrf.mxu0
        %v1502 = vadd.f32 0.0, %v1501
        %1503 = vdwg.mxu0
        %1504 = vmatpush.msra.mxu0 0.0
        %1505 = vmatpush.msra.mxu0 0.0
        %1506 = vmatpush.msra.mxu0 0.0
        %1507 = vmatpush.msra.mxu0 0.0
        %1508 = vmatpush.msra.mxu0 0.0
        %1509 = vmatpush.msra.mxu0 0.0
        %1510 = vmatpush.msra.mxu0 0.0
        %1511 = vmatpush.msra.mxu0 0.0
        %1512 = vmatpush.msra.mxu0 0.0
        %1513 = vmatpush.msra.mxu0 0.0
        %1514 = vmatpush.msra.mxu0 0.0
        %1515 = vmatpush.msra.mxu0 0.0
        %1516 = vmatpush.msra.mxu0 0.0
        %1517 = vmatpush.msra.mxu0 0.0
        %1518 = vmatpush.msra.mxu0 0.0
        %1519 = vmatpush.msra.mxu0 %v1482
        %1520 = vmatmul.f32.gmra.mxu0 %v1478
        %v1521 = vpop.f32.mrf.mxu0
        %v1522 = vadd.f32 0.0, %v1521
        %1523 = vdwg.mxu0
        %v1524 = vld [vmem:[%s14] sm:$0xff]
        %1526 = vset.pattern.permute.xlu0 0
        %1527 = vperm.xlu0 %1526, %v1524
        %v1528 = vpop.permute.xlu0 %1527
        %v1530 = vmul.f32 %v1502, %v1528
        %v1531 = vmul.f32 %v1522, %v1528
        %v1532 = vld [vmem:[%s15] sm:$0xff]
        %1534 = vset.pattern.permute.xlu0 0
        %1535 = vperm.xlu0 %1534, %v1532
        %v1536 = vpop.permute.xlu0 %1535
        %v1538 = vadd.f32 %v1530, %v1536
        %v1539 = vadd.f32 %v1531, %v1536
        %vm1540 = vcmp.ge.f32.partialorder %v1538, 0.0
        %vm1541 = vcmp.ge.f32.partialorder %v1539, 0.0
        %v1542 = vmul.f32 %v1538, 0.1
        %v1543 = vmul.f32 %v1539, 0.1
        %v1544 = vsel %vm1540, %v1538, %v1542
        %v1545 = vsel %vm1541, %v1539, %v1543
        %v1546 = vld [vmem:[%s16] sm:$0xff]
        %vm1547 = vcmask 130048
        %v1549 = vsel %vm1547, %v1546, 0
        %1551 = vmatpush.msra.mxu0 0.0
        %1552 = vmatpush.msra.mxu0 0.0
        %1553 = vmatpush.msra.mxu0 0.0
        %1554 = vmatpush.msra.mxu0 0.0
        %1555 = vmatpush.msra.mxu0 0.0
        %1556 = vmatpush.msra.mxu0 0.0
        %1557 = vmatpush.msra.mxu0 0.0
        %1558 = vmatpush.msra.mxu0 0.0
        %1559 = vmatpush.msra.mxu0 0.0
        %1560 = vmatpush.msra.mxu0 0.0
        %1561 = vmatpush.msra.mxu0 0.0
        %1562 = vmatpush.msra.mxu0 0.0
        %1563 = vmatpush.msra.mxu0 0.0
        %1564 = vmatpush.msra.mxu0 0.0
        %1565 = vmatpush.msra.mxu0 %v1544
        %1566 = vmatpush.msra.mxu0 %v1471
        %1567 = vmatmul.f32.gmra.mxu0 %v1549
        %v1568 = vpop.f32.mrf.mxu0
        %v1569 = vadd.f32 0.0, %v1568
        %1570 = vdwg.mxu0
        %1571 = vmatpush.msra.mxu0 0.0
        %1572 = vmatpush.msra.mxu0 0.0
        %1573 = vmatpush.msra.mxu0 0.0
        %1574 = vmatpush.msra.mxu0 0.0
        %1575 = vmatpush.msra.mxu0 0.0
        %1576 = vmatpush.msra.mxu0 0.0
        %1577 = vmatpush.msra.mxu0 0.0
        %1578 = vmatpush.msra.mxu0 0.0
        %1579 = vmatpush.msra.mxu0 0.0
        %1580 = vmatpush.msra.mxu0 0.0
        %1581 = vmatpush.msra.mxu0 0.0
        %1582 = vmatpush.msra.mxu0 0.0
        %1583 = vmatpush.msra.mxu0 0.0
        %1584 = vmatpush.msra.mxu0 0.0
        %1585 = vmatpush.msra.mxu0 %v1545
        %1586 = vmatpush.msra.mxu0 %v1472
        %1587 = vmatmul.f32.gmra.mxu0 %v1549
        %v1588 = vpop.f32.mrf.mxu0
        %v1589 = vadd.f32 0.0, %v1588
        %1590 = vdwg.mxu0
        %v1591 = vld [vmem:[%s17] sm:$0xff]
        %1593 = vset.pattern.permute.xlu0 0
        %1594 = vperm.xlu0 %1593, %v1591
        %v1595 = vpop.permute.xlu0 %1594
        %v1597 = vmul.f32 %v1569, %v1595
        %v1598 = vmul.f32 %v1589, %v1595
        %v1599 = vld [vmem:[%s18] sm:$0xff]
        %1601 = vset.pattern.permute.xlu0 0
        %1602 = vperm.xlu0 %1601, %v1599
        %v1603 = vpop.permute.xlu0 %1602
        %v1605 = vadd.f32 %v1597, %v1603
        %v1606 = vadd.f32 %v1598, %v1603
        %v1607 = vsub.f32 0.0, %v1605
        %v1608 = vsub.f32 0.0, %v1606
        %v1609 = vmul.f32 %v1607, 1.442695
        %v1610 = vpow.pop %v1609
        %v1611 = vmul.f32 %v1608, 1.442695
        %v1612 = vpow.pop %v1611
        %v1613 = vadd.f32 %v1610, 1.0
        %v1614 = vadd.f32 %v1612, 1.0
        %v1615 = vrcp.pop %v1613
        %v1616 = vmul.f32 %v1613, %v1615
        %v1617 = vsub.f32 1.0, %v1616
        %v1618 = vmul.f32 %v1615, %v1617
        %v1619 = vadd.f32 %v1615, %v1618
        %vm1620 = vweird.f32 %v1613
        %vm1621 = vweird.f32 %v1615
        %vm1622 = vmor %vm1620, %vm1621
        %v1623 = vsel %vm1622, %v1615, %v1619
        %v1624 = vand.u32 2147483647, %v1613
        %vm1625 = vcmp.eq.f32.partialorder %v1624, 8.507059e+37
        %v1626 = vand.u32 %v1613, 2147483648
        %v1627 = vor.u32 1.1754944e-38, %v1626
        %v1628 = vsel %vm1625, %v1627, %v1623
        %v1629 = vmul.f32 1.0, %v1628
        %v1630 = vrcp.pop %v1614
        %v1631 = vmul.f32 %v1614, %v1630
        %v1632 = vsub.f32 1.0, %v1631
        %v1633 = vmul.f32 %v1630, %v1632
        %v1634 = vadd.f32 %v1630, %v1633
        %vm1635 = vweird.f32 %v1614
        %vm1636 = vweird.f32 %v1630
        %vm1637 = vmor %vm1635, %vm1636
        %v1638 = vsel %vm1637, %v1630, %v1634
        %v1639 = vand.u32 2147483647, %v1614
        %vm1640 = vcmp.eq.f32.partialorder %v1639, 8.507059e+37
        %v1641 = vand.u32 %v1614, 2147483648
        %v1642 = vor.u32 1.1754944e-38, %v1641
        %v1643 = vsel %vm1640, %v1642, %v1638
        %v1644 = vmul.f32 1.0, %v1643
        %v1645 = vmul.f32 %v1605, %v1629
        %v1646 = vmul.f32 %v1606, %v1644
        %1647 = vst [vmem:[%s595] sm:$0xff] %v1645
        %1648 = vst [vmem:[%s595 + $0x8] sm:$0xff] %v1646
        %s1649 = sand.u32 %s445, 1
        %s1650 = scalar_lea.sflag [#allocation4], %s1649
        %s1651 = sand.u32 %s445, 1
        %s1652 = smul.addr %s1651, 16
        %s1653 = scalar_lea.vmem [#allocation3], %s1652
        // Predicated region
        $region97: #{tpu_custom_call.1} parent=95 // pred_check
          %p1654 = pneg %p455
        $region98: #{tpu_custom_call.1} parent=95 // pred_check_branch
          %1656 = sbr.rel (%p1654) target = $region100
        $region99: #{tpu_custom_call.1} parent=95 // pred_region
          %1658 = vsyncadd %s1650, 0
          %s1659 = smul.addr %s33, 2
          %s1660 = smul.addr %s1659, 8
          %s1661 = scalar_lea.hbm %s19, %s1660
          %s1663 = sshll.u32 %s1653, 4
          %s1664 = int_to_ptr.vmem [resolvable:$true] %s1663
          %s1665 = sshll.u32 %s1661, 4
          %s1666 = int_to_ptr.hbm [resolvable:$true] %s1665
          %1668 = dma.vmem_to_hbm [thread:$0]  %s1664, 256, %s1666, %s1650
        $region100: #{tpu_custom_call.1} parent=95 // pred_fallthru
          _
      $region96: #{tpu_custom_call.1} parent=5 // pred_fallthru
        _
      %p1669 = scmp.le.s32.totalorder 2, %s28
      // Predicated region
      $region101: #{tpu_custom_call.1} parent=5 // pred_check
        %p1670 = pneg %p1669
      $region102: #{tpu_custom_call.1} parent=5 // pred_check_branch
        %1672 = sbr.rel (%p1670) target = $region104
      $region103: #{tpu_custom_call.1} parent=5 // pred_region
        %s1673 = ssub.s32 %s28, 2
        // Predicated region
        $region105: #{tpu_custom_call.1} parent=103 // pred_check
          %p1674 = pneg %p461
        $region106: #{tpu_custom_call.1} parent=103 // pred_check_branch
          %1676 = sbr.rel (%p1674) target = $region108
        $region107: #{tpu_custom_call.1} parent=103 // pred_region
          %s1677 = sand.u32 %s446, 1
          %s1678 = scalar_lea.sflag [#allocation4], %s1677
          %s1679 = sand.u32 %s446, 1
          %s1680 = smul.addr %s1679, 16
          %s1681 = scalar_lea.vmem [#allocation3], %s1680
          %1683 = dma.done %s1678, 256
        $region108: #{tpu_custom_call.1} parent=103 // pred_fallthru
          _
      $region104: #{tpu_custom_call.1} parent=5 // pred_fallthru
        _
    $region6: #{tpu_custom_call.1} parent=1 // loop_footer
      %s32 = sadd.s32 1, %s28
    $region7: #{tpu_custom_call.1} parent=1 // loop_footer_branch
      %27 = sbr.rel target = $region3
    $region8: #{tpu_custom_call.1} parent=1 // loop_exit
      _
    %1684 = vsyncpa [#allocation4], 1
    %s1685 = scalar_lea.sflag [#allocation4], 1
    %1686 = vsyncpa %s1685, 1

</llo_original>
